<compile_context>
chip_gen: v5e
topology: v5e:2x2
jax: 0.10.0
libtpu: 0.0.40
codegen_flags: <defaults>
</compile_context>

<pallas_src>
import jax
import jax.numpy as jnp
from jax import lax
from jax.experimental import pallas as pl
from jax.experimental.pallas import tpu as pltpu


# ----------------------------------------------------------------------------
# Pallas kernel: per-row reductions of relu(cd) and relu(cd)*fd, fd never built
# ----------------------------------------------------------------------------
def _corr_rowstats_kernel(f1_ref, f2_ref, c1_ref, c2t_ref, out_ref):
    # f1_ref : (1, TP, Cf)  row tile of normalized feats           (compute dtype)
    # f2_ref : (1, Pp, Cf)  batch-resident normalized feats_pos    (compute dtype)
    # c1_ref : (1, TP, Cc)  row tile of normalized code            (compute dtype)
    # c2t_ref: (1, Cc, Pp)  batch-resident normalized code_pos, channel-major
    # out_ref: (1, 2,  TP)  rows = [row_rc, row_a]                 (f32, lane-dense)
    dn = (((1,), (0,)), ((), ()))   # plain NN matmul: contract lhs[-1] with rhs[0]
    cc = c1_ref.shape[-1]

    # cd = c1 @ c2t.  For tiny Cc the MXU pass is ~all padding -> do it on the
    # VPU as Cc broadcast multiply-adds; otherwise use the MXU.
    if cc <= 8:
        c1 = c1_ref[0].astype(jnp.float32)        # (TP, Cc)
        c2t = c2t_ref[0].astype(jnp.float32)      # (Cc, Pp)
        cd = c1[:, 0:1] * c2t[0:1, :]
        for k in range(1, cc):
            cd = cd + c1[:, k:k + 1] * c2t[k:k + 1, :]
    else:
        cd = lax.dot_general(c1_ref[0], c2t_ref[0], dn,
                             preferred_element_type=jnp.float32)    # (TP, Pp)

    rc = jnp.maximum(cd, 0.0)                                       # cd.clamp(0), f32
    row_rc = jnp.sum(rc, axis=1)                                    # (TP,)

    # sum_j rc[i,j]*fd[i,j] == sum_c (rc @ f2)[i,c] * f1[i,c]   (fd eliminated;
    # the MXU contraction dim is Pp, a 128-multiple).
    f2 = f2_ref[0]                                                  # (Pp, Cf)
    w = lax.dot_general(rc.astype(f2.dtype), f2, dn,
                        preferred_element_type=jnp.float32)         # (TP, Cf)
    row_a = jnp.sum(w * f1_ref[0].astype(jnp.float32), axis=1)      # (TP,)

    out_ref[...] = jnp.concatenate(
        [row_rc.reshape(1, 1, -1), row_a.reshape(1, 1, -1)], axis=1)


def _round_up(x, m):
    return (x + m - 1) // m * m


def _choose_tiles(p):
    # Column/row padding to a 128 multiple; tp=256 only when it divides Pp so
    # padding never inflates both matmul dims (review item: P=1600 -> 1664/128,
    # not 1792/256).
    pp = _round_up(max(p, 1), 128)
    tp = 256 if pp % 256 == 0 else 128
    return min(tp, pp), pp


def _vmem_limit_bytes(tp, pp, cf, cc, itemsize):
    # Actual footprint: double-buffered inputs + double-buffered output +
    # in-kernel f32 intermediates (cd/rc, w) with 2x headroom.  Sized to fit
    # v7x's 64 MiB/TC comfortably (also well under v5e/v6e's 128 MiB).
    inputs = 2 * itemsize * (tp * cf + tp * cc + pp * cf + cc * pp)
    outputs = 2 * 4 * 2 * tp
    scratch = 4 * (2 * tp * pp + tp * cf + 2 * pp + 2 * tp)
    need = 2 * (inputs + outputs + scratch) + (8 << 20)
    return int(min(max(need, 24 << 20), 56 << 20))


def _rowstats(f1p, f2p, c1p, c2tp, tp):
    """f1p/c1p: [N, Pp, C*] row operands; f2p: [N, Pp, Cf]; c2tp: [N, Cc, Pp]
    (all pre-normalized / zero-padded) -> [N, 2, Pp] rows = [row_rc, row_a]."""
    n, pp, cf = f2p.shape
    cc = c2tp.shape[1]
    grid = (n, pp // tp)

    return pl.pallas_call(
        _corr_rowstats_kernel,
        out_shape=jax.ShapeDtypeStruct((n, 2, pp), jnp.float32),
        grid=grid,
        in_specs=[
            pl.BlockSpec((1, tp, cf), lambda b, pi: (b, pi, 0)),
            pl.BlockSpec((1, pp, cf), lambda b, pi: (b, 0, 0)),   # batch-resident
            pl.BlockSpec((1, tp, cc), lambda b, pi: (b, pi, 0)),
            pl.BlockSpec((1, cc, pp), lambda b, pi: (b, 0, 0)),   # batch-resident
        ],
        out_specs=pl.BlockSpec((1, 2, tp), lambda b, pi: (b, 0, pi)),
        compiler_params=pltpu.CompilerParams(
            dimension_semantics=("parallel", "parallel"),
            vmem_limit_bytes=_vmem_limit_bytes(tp, pp, cf, cc,
                                               f1p.dtype.itemsize)),
    )(f1p, f2p, c1p, c2tp)


# ----------------------------------------------------------------------------
# JAX glue: grid_sample as one-hot matmul, normalization, layout prep
# ----------------------------------------------------------------------------
def _sample_points(t, coords):
    """flatten(F.grid_sample(t, coords.permute(0,2,1,3), 'border',
    align_corners=True)) -> (N, P, C), expressed as a one-hot
    [P, H*W] @ [H*W, C] matmul (XLA gathers are slow on TPU; MXU matmuls are not).
    """
    # TODO(synk): the data-dependent bilinear gather stays in the JAX wrapper;
    # it has no clean BlockSpec expression (would need manual in-kernel DMA gather).
    n, c, h, w = t.shape
    grid = jnp.transpose(coords, (0, 2, 1, 3))        # torch coords.permute(0,2,1,3)
    ho, wo = grid.shape[1], grid.shape[2]
    p = ho * wo
    x = grid[..., 0].reshape(n, p)
    y = grid[..., 1].reshape(n, p)
    ix = jnp.clip((x + 1.0) * 0.5 * (w - 1), 0.0, w - 1)   # border padding
    iy = jnp.clip((y + 1.0) * 0.5 * (h - 1), 0.0, h - 1)
    ix0f = jnp.floor(ix)
    iy0f = jnp.floor(iy)
    wx = ix - ix0f
    wy = iy - iy0f
    ix0 = ix0f.astype(jnp.int32)
    iy0 = iy0f.astype(jnp.int32)
    ix1 = jnp.minimum(ix0 + 1, w - 1)
    iy1 = jnp.minimum(iy0 + 1, h - 1)

    def corner(iy_, ix_, wgt):
        oh = jax.nn.one_hot(iy_ * w + ix_, h * w, dtype=t.dtype)  # (N, P, H*W)
        return oh * wgt[..., None]

    wmat = (corner(iy0, ix0, (1.0 - wy) * (1.0 - wx))
            + corner(iy0, ix1, (1.0 - wy) * wx)
            + corner(iy1, ix0, wy * (1.0 - wx))
            + corner(iy1, ix1, wy * wx))                          # (N, P, H*W)
    timg = jnp.transpose(t.reshape(n, c, h * w), (0, 2, 1))       # (N, H*W, C)
    return jnp.einsum('nph,nhc->npc', wmat, timg)                 # (N, P, C)


def _l2norm_points(t):
    # F.normalize(t, dim=channel, eps=1e-10); channel is the last axis here.
    nrm = jnp.sqrt(jnp.sum(t * t, axis=-1, keepdims=True))
    return t / jnp.maximum(nrm, 1e-10)


def _pad_points(t, pp):
    n, p, c = t.shape
    if pp == p:
        return t
    return jnp.pad(t, ((0, 0), (0, pp - p), (0, 0)))


def contrastive_correlation_loss(orig_feats, orig_feats_pos, orig_code,
                                 orig_code_pos, coords1, coords2,
                                 dtype=jnp.bfloat16):
    """Forward pass of ContrastiveCorrelationLoss (coords passed explicitly)."""
    # TODO(synk): torch.rand coords are drawn with jax.random outside the module
    # (same distribution / semantics, different RNG stream).
    f1 = _l2norm_points(_sample_points(orig_feats, coords1))       # (N, P, Cf) f32
    f2 = _l2norm_points(_sample_points(orig_feats_pos, coords2))
    c1 = _l2norm_points(_sample_points(orig_code, coords1))        # (N, P, Cc) f32
    c2 = _l2norm_points(_sample_points(orig_code_pos, coords2))

    n, p, _ = f1.shape
    tp, pp = _choose_tiles(p)

    # row_fd[n,i] = sum_j fd[n,i,j] = f1[n,i] . colsum(f2[n])  — O(N*P*Cf), f32,
    # hoisted out of the kernel entirely.
    row_fd = jnp.einsum('npc,nc->np', f1, jnp.sum(f2, axis=1))     # (N, P)

    # Zero-pad AFTER normalization (padded points stay exactly zero in every
    # partial sum), cast MXU operands to the compute dtype, and make the
    # resident code operand channel-major so its block is lane-dense.
    f1p = _pad_points(f1, pp).astype(dtype)
    f2p = _pad_points(f2, pp).astype(dtype)
    c1p = _pad_points(c1, pp).astype(dtype)
    c2tp = jnp.transpose(_pad_points(c2, pp), (0, 2, 1)).astype(dtype)  # (N, Cc, Pp)

    stats = _rowstats(f1p, f2p, c1p, c2tp, tp)                     # (N, 2, Pp) f32
    row_rc = stats[:, 0, :]                                        # sum_j relu(cd)
    row_a = stats[:, 1, :]                                         # sum_j relu(cd)*fd

    total = n * p * p                       # true (unpadded) element count
    old_mean = jnp.sum(row_fd) / total
    a_sum = jnp.sum(row_a)                                  # sum(relu(cd) * fd)
    b_sum = jnp.sum(row_fd * row_rc[:, :p]) / p             # sum_rows(rowmean_fd*row_rc)
    r_sum = jnp.sum(row_rc)                                 # sum(relu(cd))
    # After per-row centering the global mean of fd is exactly 0, so
    #   loss = -(A - B + old_mean * R) / (N*P*P)
    # equals the PyTorch loss (the reference's "- fd.mean()" term is ~eps).
    return -(a_sum - b_sum + old_mean * r_sum) / total


# ----------------------------------------------------------------------------
# Pure-JAX reference (literal transcription of the PyTorch forward)
# ----------------------------------------------------------------------------
def _grid_sample_border_ref(img, grid):
    n, c, h, w = img.shape
    x = grid[..., 0]
    y = grid[..., 1]
    ix = jnp.clip((x + 1.0) * 0.5 * (w - 1), 0.0, w - 1)
    iy = jnp.clip((y + 1.0) * 0.5 * (h - 1), 0.0, h - 1)
    ix0f = jnp.floor(ix)
    iy0f = jnp.floor(iy)
    wx = ix - ix0f
    wy = iy - iy0f
    ix0 = ix0f.astype(jnp.int32)
    iy0 = iy0f.astype(jnp.int32)
    ix1 = jnp.minimum(ix0 + 1, w - 1)
    iy1 = jnp.minimum(iy0 + 1, h - 1)

    flat = img.reshape(n, c, h * w)
    ho, wo = x.shape[1], x.shape[2]

    def gather(iy_, ix_):
        idx = (iy_ * w + ix_).reshape(n, 1, ho * wo)
        return jnp.take_along_axis(flat, idx, axis=2).reshape(n, c, ho, wo)

    v00 = gather(iy0, ix0)
    v01 = gather(iy0, ix1)
    v10 = gather(iy1, ix0)
    v11 = gather(iy1, ix1)
    wx = wx[:, None]
    wy = wy[:, None]
    return (v00 * (1 - wy) * (1 - wx) + v01 * (1 - wy) * wx
            + v10 * wy * (1 - wx) + v11 * wy * wx)


def _sample_ref(t, coords):
    return _grid_sample_border_ref(t, jnp.transpose(coords, (0, 2, 1, 3)))


def _reference_loss(orig_feats, orig_feats_pos, orig_code, orig_code_pos,
                    coords1, coords2):
    def nrm(t):
        d = jnp.sqrt(jnp.sum(t * t, axis=1, keepdims=True))
        return t / jnp.maximum(d, 1e-10)

    def corr(a, b):
        return jnp.einsum('nchw,ncij->nhwij', a, b)

    feats = _sample_ref(orig_feats, coords1)
    code = _sample_ref(orig_code, coords1)
    feats_pos = _sample_ref(orig_feats_pos, coords2)
    code_pos = _sample_ref(orig_code_pos, coords2)

    fd = corr(nrm(feats), nrm(feats_pos))
    old_mean = fd.mean()
    fd = fd - fd.mean(axis=(3, 4), keepdims=True)
    fd = fd - fd.mean() + old_mean
    cd = corr(nrm(code), nrm(code_pos))
    loss = -jnp.clip(cd, 0.0, None) * fd
    return loss.mean()


if __name__ == "__main__":
    key = jax.random.PRNGKey(0)
    k1, k2, k3, k4, kc1, kc2 = jax.random.split(key, 6)

    # Module has no learnable parameters (only feature_samples=40 in __init__).
    # S=17 keeps the demo small while exercising both the padding path
    # (P=289 -> Pp=384) and a multi-row-tile grid (3 row tiles per batch).
    N, Cf, Cc, H, W = 2, 32, 4, 16, 16
    S = 17  # feature_samples for the demo (module default: 40)

    orig_feats = jax.random.normal(k1, (N, Cf, H, W), jnp.float32)
    orig_feats_pos = jax.random.normal(k2, (N, Cf, H, W), jnp.float32)
    orig_code = jax.random.normal(k3, (N, Cc, H, W), jnp.float32)
    orig_code_pos = jax.random.normal(k4, (N, Cc, H, W), jnp.float32)

    coords1 = jax.random.uniform(kc1, (N, S, S, 2), jnp.float32) * 2.0 - 1.0
    coords2 = jax.random.uniform(kc2, (N, S, S, 2), jnp.float32) * 2.0 - 1.0

    args = (orig_feats, orig_feats_pos, orig_code, orig_code_pos, coords1, coords2)
    loss_fn = jax.jit(contrastive_correlation_loss, static_argnames=("dtype",))

    out_bf16 = jax.block_until_ready(loss_fn(*args, dtype=jnp.bfloat16))
    out_f32 = jax.block_until_ready(loss_fn(*args, dtype=jnp.float32))
    ref = jax.block_until_ready(_reference_loss(*args))

    # f32 operand path: algorithmically exact up to fp reassociation.
    assert jnp.allclose(out_f32, ref, rtol=1e-4, atol=2e-5), (float(out_f32), float(ref))
    # bf16 operand path (production default, MXU-native): relaxed tolerance.
    assert jnp.allclose(out_bf16, ref, rtol=2e-2, atol=3e-3), (float(out_bf16), float(ref))
    print("KERNEL_OK")
</pallas_src>

<mosaic_0001>
module attributes {stable_mosaic.version = 11 : i64} {
  func.func @_corr_rowstats_kernel(%arg0: i32, %arg1: i32, %arg2: memref<1x128x32xbf16, #tpu.memory_space<vmem>>, %arg3: memref<1x384x32xbf16, #tpu.memory_space<vmem>>, %arg4: memref<1x128x4xbf16, #tpu.memory_space<vmem>>, %arg5: memref<1x4x384xbf16, #tpu.memory_space<vmem>>, %arg6: memref<1x2x128xf32, #tpu.memory_space<vmem>>) attributes {dimension_semantics = [#tpu.dimension_semantics<parallel>, #tpu.dimension_semantics<parallel>], iteration_bounds = array<i64: 2, 3>, scalar_prefetch = 0 : i64, scratch_operands = 0 : i64, tpu.core_type = #tpu.core_type<tc>, window_params = [{transform_indices = @transform_0, window_bounds = array<i64: 1, 128, 32>}, {transform_indices = @transform_1, window_bounds = array<i64: 1, 384, 32>}, {transform_indices = @transform_2, window_bounds = array<i64: 1, 128, 4>}, {transform_indices = @transform_3, window_bounds = array<i64: 1, 4, 384>}, {transform_indices = @transform_4, window_bounds = array<i64: 1, 2, 128>}]} {
    %c0 = arith.constant 0 : index
    %c0_0 = arith.constant 0 : index
    %c0_1 = arith.constant 0 : index
    %0 = vector.load %arg4[%c0, %c0_0, %c0_1] : memref<1x128x4xbf16, #tpu.memory_space<vmem>>, vector<1x128x4xbf16>
    %1 = vector.shape_cast %0 : vector<1x128x4xbf16> to vector<128x4xbf16>
    %2 = arith.extf %1 : vector<128x4xbf16> to vector<128x4xf32>
    %c0_2 = arith.constant 0 : index
    %c0_3 = arith.constant 0 : index
    %c0_4 = arith.constant 0 : index
    %3 = vector.load %arg5[%c0_2, %c0_3, %c0_4] : memref<1x4x384xbf16, #tpu.memory_space<vmem>>, vector<1x4x384xbf16>
    %4 = vector.shape_cast %3 : vector<1x4x384xbf16> to vector<4x384xbf16>
    %5 = arith.extf %4 : vector<4x384xbf16> to vector<4x384xf32>
    %6 = vector.extract_strided_slice %2 {offsets = [0, 0], sizes = [128, 1], strides = [1, 1]} : vector<128x4xf32> to vector<128x1xf32>
    %7 = vector.extract_strided_slice %5 {offsets = [0, 0], sizes = [1, 384], strides = [1, 1]} : vector<4x384xf32> to vector<1x384xf32>
    %8 = vector.broadcast %6 : vector<128x1xf32> to vector<128x384xf32>
    %9 = vector.broadcast %7 : vector<1x384xf32> to vector<128x384xf32>
    %10 = arith.mulf %8, %9 : vector<128x384xf32>
    %11 = vector.extract_strided_slice %2 {offsets = [0, 1], sizes = [128, 1], strides = [1, 1]} : vector<128x4xf32> to vector<128x1xf32>
    %12 = vector.extract_strided_slice %5 {offsets = [1, 0], sizes = [1, 384], strides = [1, 1]} : vector<4x384xf32> to vector<1x384xf32>
    %13 = vector.broadcast %11 : vector<128x1xf32> to vector<128x384xf32>
    %14 = vector.broadcast %12 : vector<1x384xf32> to vector<128x384xf32>
    %15 = arith.mulf %13, %14 : vector<128x384xf32>
    %16 = arith.addf %10, %15 : vector<128x384xf32>
    %17 = vector.extract_strided_slice %2 {offsets = [0, 2], sizes = [128, 1], strides = [1, 1]} : vector<128x4xf32> to vector<128x1xf32>
    %18 = vector.extract_strided_slice %5 {offsets = [2, 0], sizes = [1, 384], strides = [1, 1]} : vector<4x384xf32> to vector<1x384xf32>
    %19 = vector.broadcast %17 : vector<128x1xf32> to vector<128x384xf32>
    %20 = vector.broadcast %18 : vector<1x384xf32> to vector<128x384xf32>
    %21 = arith.mulf %19, %20 : vector<128x384xf32>
    %22 = arith.addf %16, %21 : vector<128x384xf32>
    %23 = vector.extract_strided_slice %2 {offsets = [0, 3], sizes = [128, 1], strides = [1, 1]} : vector<128x4xf32> to vector<128x1xf32>
    %24 = vector.extract_strided_slice %5 {offsets = [3, 0], sizes = [1, 384], strides = [1, 1]} : vector<4x384xf32> to vector<1x384xf32>
    %25 = vector.broadcast %23 : vector<128x1xf32> to vector<128x384xf32>
    %26 = vector.broadcast %24 : vector<1x384xf32> to vector<128x384xf32>
    %27 = arith.mulf %25, %26 : vector<128x384xf32>
    %28 = arith.addf %22, %27 : vector<128x384xf32>
    %cst = arith.constant 0.000000e+00 : f32
    %29 = vector.broadcast %cst : f32 to vector<128x384xf32>
    %30 = arith.maximumf %28, %29 : vector<128x384xf32>
    %cst_5 = arith.constant dense<0.000000e+00> : vector<128xf32>
    %31 = vector.multi_reduction <add>, %30, %cst_5 [1] : vector<128x384xf32> to vector<128xf32>
    %c0_6 = arith.constant 0 : index
    %c0_7 = arith.constant 0 : index
    %c0_8 = arith.constant 0 : index
    %32 = vector.load %arg3[%c0_6, %c0_7, %c0_8] : memref<1x384x32xbf16, #tpu.memory_space<vmem>>, vector<1x384x32xbf16>
    %33 = vector.shape_cast %32 : vector<1x384x32xbf16> to vector<384x32xbf16>
    %34 = arith.truncf %30 : vector<128x384xf32> to vector<128x384xbf16>
    %cst_9 = arith.constant dense<0.000000e+00> : vector<128x32xf32>
    %35 = tpu.matmul %34, %33, %cst_9 {dimension_numbers = #tpu.dot_dimension_numbers<[1], [0], [0], [1], [0, 0, 1, 1], [], []>} : vector<128x384xbf16>, vector<384x32xbf16>, vector<128x32xf32> -> vector<128x32xf32>
    %c0_10 = arith.constant 0 : index
    %c0_11 = arith.constant 0 : index
    %c0_12 = arith.constant 0 : index
    %36 = vector.load %arg2[%c0_10, %c0_11, %c0_12] : memref<1x128x32xbf16, #tpu.memory_space<vmem>>, vector<1x128x32xbf16>
    %37 = vector.shape_cast %36 : vector<1x128x32xbf16> to vector<128x32xbf16>
    %38 = arith.extf %37 : vector<128x32xbf16> to vector<128x32xf32>
    %39 = arith.mulf %35, %38 : vector<128x32xf32>
    %cst_13 = arith.constant dense<0.000000e+00> : vector<128xf32>
    %40 = vector.multi_reduction <add>, %39, %cst_13 [1] : vector<128x32xf32> to vector<128xf32>
    %41 = vector.shape_cast %31 : vector<128xf32> to vector<1x1x128xf32>
    %42 = vector.shape_cast %40 : vector<128xf32> to vector<1x1x128xf32>
    %43 = tpu.concatenate %41, %42 in 1 : vector<1x1x128xf32>, vector<1x1x128xf32> -> vector<1x2x128xf32>
    %c0_14 = arith.constant 0 : index
    %c0_15 = arith.constant 0 : index
    %c0_16 = arith.constant 0 : index
    %44 = vector.load %arg6[%c0_14, %c0_15, %c0_16] : memref<1x2x128xf32, #tpu.memory_space<vmem>>, vector<1x2x128xf32>
    tpu.vector_store %arg6[%c0_14, %c0_15, %c0_16], %43 {strides = array<i32>} : memref<1x2x128xf32, #tpu.memory_space<vmem>>, vector<1x2x128xf32>,
    return
  }
  func.func @transform_0(%arg0: i32, %arg1: i32) -> (i32, i32, i32) {
    %c0_i32 = arith.constant 0 : i32
    %c0_i32_0 = arith.constant 0 : i32
    return %arg0, %arg1, %c0_i32 : i32, i32, i32
  }
  func.func @transform_1(%arg0: i32, %arg1: i32) -> (i32, i32, i32) {
    %c0_i32 = arith.constant 0 : i32
    %c0_i32_0 = arith.constant 0 : i32
    %c0_i32_1 = arith.constant 0 : i32
    return %arg0, %c0_i32, %c0_i32_0 : i32, i32, i32
  }
  func.func @transform_2(%arg0: i32, %arg1: i32) -> (i32, i32, i32) {
    %c0_i32 = arith.constant 0 : i32
    %c0_i32_0 = arith.constant 0 : i32
    return %arg0, %arg1, %c0_i32 : i32, i32, i32
  }
  func.func @transform_3(%arg0: i32, %arg1: i32) -> (i32, i32, i32) {
    %c0_i32 = arith.constant 0 : i32
    %c0_i32_0 = arith.constant 0 : i32
    %c0_i32_1 = arith.constant 0 : i32
    return %arg0, %c0_i32, %c0_i32_0 : i32, i32, i32
  }
  func.func @transform_4(%arg0: i32, %arg1: i32) -> (i32, i32, i32) {
    %c0_i32 = arith.constant 0 : i32
    %c0_i32_0 = arith.constant 0 : i32
    return %arg0, %c0_i32, %arg1 : i32, i32, i32
  }
}

</mosaic_0001>

<llo_original>
// kernel: contrastive_correlation_loss.1
$region0: #{contrastive_correlation_loss.1}
  #allocation0 [shape = 'u32[]', space=smem, size = 0x4, offset = 0x4, fixed_abs, tag = 'smem constant byte address 0x4 - core index']
  #allocation1 [shape = 'u32[72,128]{1,0:T(1,128)}', space=vmem, size = 0x9000, scoped, tag = 'internal scratch']
  %s0 = inlined_call_operand.vmem [shape: bf16[2,384,32], index: 0, kind: input, shape index: {}]
  %s1 = inlined_call_operand.vmem [shape: bf16[2,384,32], index: 1, kind: input, shape index: {}]
  %s2 = inlined_call_operand.vmem [shape: bf16[2,384,4], index: 2, kind: input, shape index: {}]
  %s3 = inlined_call_operand.vmem [shape: bf16[2,4,384], index: 3, kind: input, shape index: {}]
  %s4 = inlined_call_operand.vmem [shape: f32[2,2,384], index: 4, kind: output, shape index: {}]
  %s5 = sld [smem:[#allocation0]]
  $region49: #{contrastive_correlation_loss.1} parent=0
    _
  %s7 = ssub.s32 1, %s5
  %s8 = scalar_select 0, %s7, %s5
  loop: start=0, step=1, limit=8
  $region2: #{contrastive_correlation_loss.1} parent=0 // loop_pre_header
    _
  $region3: #{contrastive_correlation_loss.1} parent=0 // loop_header
    %s10 = sphi 0, %s14
    %p11 = scmp.ge.s32.totalorder %s10, 8
    %s17 = sphi 0, %s29
    %s18 = sphi 0, %s25
    %s19 = sphi 0, %s17
    %s20 = sphi 0, %s18
    %s21 = sphi 0, %s19
    %s22 = sphi 0, %s20
    %s34 = sphi 0, %s36
    %s37 = sphi 0, %s34
    %s38 = sphi 0, %s37
    %s54 = sphi 0, %s38
    %s60 = sphi 0, %s62
    %s63 = sphi 0, %s60
    %s64 = sphi 0, %s63
    %s80 = sphi 0, %s64
    %s88 = sphi 0, %s90
    %s91 = sphi 0, %s88
    %s92 = sphi 0, %s91
    %s108 = sphi 0, %s92
    %s114 = sphi 0, %s116
    %s117 = sphi 0, %s114
    %s118 = sphi 0, %s117
    %s134 = sphi 0, %s118
    %s142 = sphi 0, %s144
    %s145 = sphi 0, %s142
    %s146 = sphi 0, %s145
    %s162 = sphi 0, %s146
  $region4: #{contrastive_correlation_loss.1} parent=0 // loop_header_branch
    %13 = sbr.rel (%p11) target = $region8
  $region5: #{contrastive_correlation_loss.1} parent=0 // loop_body
    %s15 = ssub.s32 %s10, 1
    %s16 = ssub.s32 %s10, 2
    %s23 = sadd.s32 1, %s18
    %p24 = scmp.ge.s32.totalorder %s23, 3
    %s25 = scalar_select %p24, 0, %s23
    %s26 = sadd.s32 1, %s17
    %s27 = scalar_select %p24, %s26, %s17
    %p28 = scmp.ge.s32.totalorder %s27, 2
    %s29 = scalar_select %p28, 0, %s27
    %s30 = ssub.s32 %s17, %s29
    %s31 = ssub.s32 %s18, %s25
    %s32 = sor.u32 %s30, %s31
    %p33 = scmp.eq.s32.totalorder %s32, 0
    %s35 = sadd.s32 %s34, 1
    %s36 = scalar_select %p33, %s34, %s35
    %p39 = pneg %p33
    %p40 = scmp.eq.s32.totalorder %s10, 5
    %p41 = por %p39, %p40
    %p42 = scmp.ne.s32.totalorder %s34, %s37
    %p43 = scmp.eq.s32.totalorder %s10, 0
    %p44 = por %p42, %p43
    %p45 = scmp.ne.s32.totalorder %s34, %s37
    %p46 = scmp.eq.s32.totalorder %s15, 5
    %p47 = por %p45, %p46
    %p48 = scmp.ne.s32.totalorder %s37, %s38
    %p49 = scmp.eq.s32.totalorder %s15, 0
    %p50 = por %p48, %p49
    %p51 = scmp.ne.s32.totalorder %s37, %s38
    %p52 = scmp.eq.s32.totalorder %s16, 5
    %p53 = por %p51, %p52
    %p55 = scmp.ne.s32.totalorder %s38, %s54
    %p56 = scmp.eq.s32.totalorder %s16, 0
    %p57 = por %p55, %p56
    %s58 = ssub.s32 %s17, %s29
    %p59 = scmp.eq.s32.totalorder %s58, 0
    %s61 = sadd.s32 %s60, 1
    %s62 = scalar_select %p59, %s60, %s61
    %p65 = pneg %p59
    %p66 = scmp.eq.s32.totalorder %s10, 5
    %p67 = por %p65, %p66
    %p68 = scmp.ne.s32.totalorder %s60, %s63
    %p69 = scmp.eq.s32.totalorder %s10, 0
    %p70 = por %p68, %p69
    %p71 = scmp.ne.s32.totalorder %s60, %s63
    %p72 = scmp.eq.s32.totalorder %s15, 5
    %p73 = por %p71, %p72
    %p74 = scmp.ne.s32.totalorder %s63, %s64
    %p75 = scmp.eq.s32.totalorder %s15, 0
    %p76 = por %p74, %p75
    %p77 = scmp.ne.s32.totalorder %s63, %s64
    %p78 = scmp.eq.s32.totalorder %s16, 5
    %p79 = por %p77, %p78
    %p81 = scmp.ne.s32.totalorder %s64, %s80
    %p82 = scmp.eq.s32.totalorder %s16, 0
    %p83 = por %p81, %p82
    %s84 = ssub.s32 %s17, %s29
    %s85 = ssub.s32 %s18, %s25
    %s86 = sor.u32 %s84, %s85
    %p87 = scmp.eq.s32.totalorder %s86, 0
    %s89 = sadd.s32 %s88, 1
    %s90 = scalar_select %p87, %s88, %s89
    %p93 = pneg %p87
    %p94 = scmp.eq.s32.totalorder %s10, 5
    %p95 = por %p93, %p94
    %p96 = scmp.ne.s32.totalorder %s88, %s91
    %p97 = scmp.eq.s32.totalorder %s10, 0
    %p98 = por %p96, %p97
    %p99 = scmp.ne.s32.totalorder %s88, %s91
    %p100 = scmp.eq.s32.totalorder %s15, 5
    %p101 = por %p99, %p100
    %p102 = scmp.ne.s32.totalorder %s91, %s92
    %p103 = scmp.eq.s32.totalorder %s15, 0
    %p104 = por %p102, %p103
    %p105 = scmp.ne.s32.totalorder %s91, %s92
    %p106 = scmp.eq.s32.totalorder %s16, 5
    %p107 = por %p105, %p106
    %p109 = scmp.ne.s32.totalorder %s92, %s108
    %p110 = scmp.eq.s32.totalorder %s16, 0
    %p111 = por %p109, %p110
    %s112 = ssub.s32 %s17, %s29
    %p113 = scmp.eq.s32.totalorder %s112, 0
    %s115 = sadd.s32 %s114, 1
    %s116 = scalar_select %p113, %s114, %s115
    %p119 = pneg %p113
    %p120 = scmp.eq.s32.totalorder %s10, 5
    %p121 = por %p119, %p120
    %p122 = scmp.ne.s32.totalorder %s114, %s117
    %p123 = scmp.eq.s32.totalorder %s10, 0
    %p124 = por %p122, %p123
    %p125 = scmp.ne.s32.totalorder %s114, %s117
    %p126 = scmp.eq.s32.totalorder %s15, 5
    %p127 = por %p125, %p126
    %p128 = scmp.ne.s32.totalorder %s117, %s118
    %p129 = scmp.eq.s32.totalorder %s15, 0
    %p130 = por %p128, %p129
    %p131 = scmp.ne.s32.totalorder %s117, %s118
    %p132 = scmp.eq.s32.totalorder %s16, 5
    %p133 = por %p131, %p132
    %p135 = scmp.ne.s32.totalorder %s118, %s134
    %p136 = scmp.eq.s32.totalorder %s16, 0
    %p137 = por %p135, %p136
    %s138 = ssub.s32 %s17, %s29
    %s139 = ssub.s32 %s18, %s25
    %s140 = sor.u32 %s138, %s139
    %p141 = scmp.eq.s32.totalorder %s140, 0
    %s143 = sadd.s32 %s142, 1
    %s144 = scalar_select %p141, %s142, %s143
    %p147 = pneg %p141
    %p148 = scmp.eq.s32.totalorder %s10, 5
    %p149 = por %p147, %p148
    %p150 = scmp.ne.s32.totalorder %s142, %s145
    %p151 = scmp.eq.s32.totalorder %s10, 0
    %p152 = por %p150, %p151
    %p153 = scmp.ne.s32.totalorder %s142, %s145
    %p154 = scmp.eq.s32.totalorder %s15, 5
    %p155 = por %p153, %p154
    %p156 = scmp.ne.s32.totalorder %s145, %s146
    %p157 = scmp.eq.s32.totalorder %s15, 0
    %p158 = por %p156, %p157
    %p159 = scmp.ne.s32.totalorder %s145, %s146
    %p160 = scmp.eq.s32.totalorder %s16, 5
    %p161 = por %p159, %p160
    %p163 = scmp.ne.s32.totalorder %s146, %s162
    %p164 = scmp.eq.s32.totalorder %s16, 0
    %p165 = por %p163, %p164
    %p166 = scmp.le.s32.totalorder 1, %s10
    %p167 = scmp.lt.s32.totalorder %s10, 7
    %p168 = pnand %p166, %p167
    %p169 = pneg %p168
    // Predicated region
    $region9: #{contrastive_correlation_loss.1} parent=5 // pred_check
      _
    $region10: #{contrastive_correlation_loss.1} parent=5 // pred_check_branch
      %171 = sbr.rel (%p168) target = $region12
    $region11: #{contrastive_correlation_loss.1} parent=5 // pred_region
      %s172 = ssub.s32 %s10, 1
    $region12: #{contrastive_correlation_loss.1} parent=5 // pred_fallthru
      _
    %p173 = scmp.lt.s32.totalorder %s10, 6
    // Predicated region
    $region13: #{contrastive_correlation_loss.1} parent=5 // pred_check
      %p174 = pneg %p173
    $region14: #{contrastive_correlation_loss.1} parent=5 // pred_check_branch
      %176 = sbr.rel (%p174) target = $region16
    $region15: #{contrastive_correlation_loss.1} parent=5 // pred_region
      // Predicated region
      $region17: #{contrastive_correlation_loss.1} parent=15 // pred_check
        %p177 = pneg %p44
      $region18: #{contrastive_correlation_loss.1} parent=15 // pred_check_branch
        %179 = sbr.rel (%p177) target = $region20
      $region19: #{contrastive_correlation_loss.1} parent=15 // pred_region
        %s180 = smul.u32 16, %s18
        %p181 = scmp.lt.s32.totalorder %s17, 1
        %s182 = scalar_select %p181, %s17, 1
        %p183 = scmp.lt.s32.totalorder %s180, 47
        %s184 = scalar_select %p183, %s180, 47
        %s185 = smul.addr %s182, 48
        %s186 = sadd.s32 %s184, %s185
        %s187 = smul.addr %s186, 4
        %s188 = scalar_lea.vmem %s0, %s187
        %s189 = smul.u32 16, %s18
      $region20: #{contrastive_correlation_loss.1} parent=15 // pred_fallthru
        _
      // Predicated region
      $region21: #{contrastive_correlation_loss.1} parent=15 // pred_check
        %p190 = pneg %p70
      $region22: #{contrastive_correlation_loss.1} parent=15 // pred_check_branch
        %192 = sbr.rel (%p190) target = $region24
      $region23: #{contrastive_correlation_loss.1} parent=15 // pred_region
        %p193 = scmp.lt.s32.totalorder %s17, 1
        %s194 = scalar_select %p193, %s17, 1
        %s195 = smul.addr %s194, 48
        %s196 = smul.addr %s195, 4
        %s197 = scalar_lea.vmem %s1, %s196
      $region24: #{contrastive_correlation_loss.1} parent=15 // pred_fallthru
        _
      // Predicated region
      $region25: #{contrastive_correlation_loss.1} parent=15 // pred_check
        %p198 = pneg %p98
      $region26: #{contrastive_correlation_loss.1} parent=15 // pred_check_branch
        %200 = sbr.rel (%p198) target = $region28
      $region27: #{contrastive_correlation_loss.1} parent=15 // pred_region
        %s201 = smul.u32 16, %s18
        %p202 = scmp.lt.s32.totalorder %s17, 1
        %s203 = scalar_select %p202, %s17, 1
        %p204 = scmp.lt.s32.totalorder %s201, 47
        %s205 = scalar_select %p204, %s201, 47
        %s206 = smul.addr %s203, 48
        %s207 = sadd.s32 %s205, %s206
        %s208 = smul.addr %s207, 4
        %s209 = scalar_lea.vmem %s2, %s208
        %s210 = smul.u32 16, %s18
      $region28: #{contrastive_correlation_loss.1} parent=15 // pred_fallthru
        _
      // Predicated region
      $region29: #{contrastive_correlation_loss.1} parent=15 // pred_check
        %p211 = pneg %p124
      $region30: #{contrastive_correlation_loss.1} parent=15 // pred_check_branch
        %213 = sbr.rel (%p211) target = $region32
      $region31: #{contrastive_correlation_loss.1} parent=15 // pred_region
        %p214 = scmp.lt.s32.totalorder %s17, 1
        %s215 = scalar_select %p214, %s17, 1
        %s216 = smul.addr %s215, 3
        %s217 = smul.addr %s216, 2
        %s218 = scalar_lea.vmem %s3, %s217
      $region32: #{contrastive_correlation_loss.1} parent=15 // pred_fallthru
        _
    $region16: #{contrastive_correlation_loss.1} parent=5 // pred_fallthru
      _
    %p219 = scmp.le.s32.totalorder 1, %s10
    %p220 = scmp.lt.s32.totalorder %s10, 7
    %p221 = pnand %p219, %p220
    %p222 = pneg %p221
    // Predicated region
    $region33: #{contrastive_correlation_loss.1} parent=5 // pred_check
      _
    $region34: #{contrastive_correlation_loss.1} parent=5 // pred_check_branch
      %224 = sbr.rel (%p221) target = $region36
    $region35: #{contrastive_correlation_loss.1} parent=5 // pred_region
      %s225 = ssub.s32 %s10, 1
      %s226 = smul.u32 16, %s20
      %p227 = scmp.lt.s32.totalorder %s19, 1
      %s228 = scalar_select %p227, %s19, 1
      %p229 = scmp.lt.s32.totalorder %s226, 47
      %s230 = scalar_select %p229, %s226, 47
      %s231 = smul.addr %s228, 48
      %s232 = sadd.s32 %s230, %s231
      %s233 = smul.addr %s232, 4
      %s234 = scalar_lea.vmem %s0, %s233
      %p235 = pneg %p50
      %p236 = pneg %p47
      %p237 = scmp.lt.s32.totalorder %s19, 1
      %s238 = scalar_select %p237, %s19, 1
      %s239 = smul.addr %s238, 48
      %s240 = smul.addr %s239, 4
      %s241 = scalar_lea.vmem %s1, %s240
      %p242 = pneg %p76
      %p243 = pneg %p73
      %s244 = smul.u32 16, %s20
      %p245 = scmp.lt.s32.totalorder %s19, 1
      %s246 = scalar_select %p245, %s19, 1
      %p247 = scmp.lt.s32.totalorder %s244, 47
      %s248 = scalar_select %p247, %s244, 47
      %s249 = smul.addr %s246, 48
      %s250 = sadd.s32 %s248, %s249
      %s251 = smul.addr %s250, 4
      %s252 = scalar_lea.vmem %s2, %s251
      %p253 = pneg %p104
      %p254 = pneg %p101
      %p255 = scmp.lt.s32.totalorder %s19, 1
      %s256 = scalar_select %p255, %s19, 1
      %s257 = smul.addr %s256, 3
      %s258 = smul.addr %s257, 2
      %s259 = scalar_lea.vmem %s3, %s258
      %p260 = pneg %p130
      %p261 = pneg %p127
      %p262 = pneg %p158
      %p263 = pneg %p155
      %p264 = scmp.lt.s32.totalorder %s19, 1
      %s265 = scalar_select %p264, %s19, 1
      %p266 = scmp.lt.s32.totalorder %s20, 2
      %s267 = scalar_select %p266, %s20, 2
      %s268 = smul.addr %s265, 3
      %s269 = sadd.s32 %s267, %s268
      %s270 = smul.addr %s269, 2
      %s271 = scalar_lea.vmem %s4, %s270
      %s272 = smul.u32 16, %s20
      %p273 = scmp.lt.s32.totalorder %s19, 1
      %s274 = scalar_select %p273, %s19, 1
      %p275 = scmp.lt.s32.totalorder %s272, 47
      %s276 = scalar_select %p275, %s272, 47
      %s277 = smul.addr %s274, 48
      %s278 = sadd.s32 %s276, %s277
      %s279 = smul.addr %s278, 4
      %s280 = scalar_lea.vmem %s0, %s279
      %s281 = smul.u32 16, %s20
      %p282 = scmp.lt.s32.totalorder %s19, 1
      %s283 = scalar_select %p282, %s19, 1
      %s284 = smul.addr %s283, 48
      %s285 = smul.addr %s284, 4
      %s286 = scalar_lea.vmem %s1, %s285
      %s287 = smul.u32 16, %s20
      %p288 = scmp.lt.s32.totalorder %s19, 1
      %s289 = scalar_select %p288, %s19, 1
      %p290 = scmp.lt.s32.totalorder %s287, 47
      %s291 = scalar_select %p290, %s287, 47
      %s292 = smul.addr %s289, 48
      %s293 = sadd.s32 %s291, %s292
      %s294 = smul.addr %s293, 4
      %s295 = scalar_lea.vmem %s2, %s294
      %s296 = smul.u32 16, %s20
      %p297 = scmp.lt.s32.totalorder %s19, 1
      %s298 = scalar_select %p297, %s19, 1
      %s299 = smul.addr %s298, 3
      %s300 = smul.addr %s299, 2
      %s301 = scalar_lea.vmem %s3, %s300
      %p302 = scmp.lt.s32.totalorder %s19, 1
      %s303 = scalar_select %p302, %s19, 1
      %p304 = scmp.lt.s32.totalorder %s20, 2
      %s305 = scalar_select %p304, %s20, 2
      %s306 = smul.addr %s303, 3
      %s307 = sadd.s32 %s305, %s306
      %s308 = smul.addr %s307, 2
      %s309 = scalar_lea.vmem %s4, %s308
      %v310 = vld [vmem:[%s295] sm:$0xf]
      %v311 = vld [vmem:[%s295 + $0x4] sm:$0xf]
      %v312 = vld [vmem:[%s295 + $0x8] sm:$0xf]
      %v313 = vld [vmem:[%s295 + $0xc] sm:$0xf]
      %v314 = vld [vmem:[%s295 + $0x10] sm:$0xf]
      %v315 = vld [vmem:[%s295 + $0x14] sm:$0xf]
      %v316 = vld [vmem:[%s295 + $0x18] sm:$0xf]
      %v317 = vld [vmem:[%s295 + $0x1c] sm:$0xf]
      %v318 = vld [vmem:[%s295 + $0x20] sm:$0xf]
      %v319 = vld [vmem:[%s295 + $0x24] sm:$0xf]
      %v320 = vld [vmem:[%s295 + $0x28] sm:$0xf]
      %v321 = vld [vmem:[%s295 + $0x2c] sm:$0xf]
      %v322 = vld [vmem:[%s295 + $0x30] sm:$0xf]
      %v323 = vld [vmem:[%s295 + $0x34] sm:$0xf]
      %v324 = vld [vmem:[%s295 + $0x38] sm:$0xf]
      %v325 = vld [vmem:[%s295 + $0x3c] sm:$0xf]
      %v326 = vunpack.c.l.bf16 %v310
      %v327 = vunpack.c.l.bf16 %v311
      %v328 = vunpack.c.l.bf16 %v312
      %v329 = vunpack.c.l.bf16 %v313
      %v330 = vunpack.c.l.bf16 %v314
      %v331 = vunpack.c.l.bf16 %v315
      %v332 = vunpack.c.l.bf16 %v316
      %v333 = vunpack.c.l.bf16 %v317
      %v334 = vunpack.c.l.bf16 %v318
      %v335 = vunpack.c.l.bf16 %v319
      %v336 = vunpack.c.l.bf16 %v320
      %v337 = vunpack.c.l.bf16 %v321
      %v338 = vunpack.c.l.bf16 %v322
      %v339 = vunpack.c.l.bf16 %v323
      %v340 = vunpack.c.l.bf16 %v324
      %v341 = vunpack.c.l.bf16 %v325
      %v342 = vld [vmem:[%s301] sm:$0x3f]
      %v343 = vunpack.c.l.bf16 %v342
      %v344 = vunpack.c.h.bf16 %v342
      %346 = vset.pattern.permute.xlu0 0
      %347 = vperm.xlu0 %346, %v326
      %v348 = vpop.permute.xlu0 %347
      %351 = vset.pattern.permute.xlu0 0
      %352 = vperm.xlu0 %351, %v327
      %v353 = vpop.permute.xlu0 %352
      %356 = vset.pattern.permute.xlu0 0
      %357 = vperm.xlu0 %356, %v328
      %v358 = vpop.permute.xlu0 %357
      %361 = vset.pattern.permute.xlu0 0
      %362 = vperm.xlu0 %361, %v329
      %v363 = vpop.permute.xlu0 %362
      %366 = vset.pattern.permute.xlu0 0
      %367 = vperm.xlu0 %366, %v330
      %v368 = vpop.permute.xlu0 %367
      %371 = vset.pattern.permute.xlu0 0
      %372 = vperm.xlu0 %371, %v331
      %v373 = vpop.permute.xlu0 %372
      %376 = vset.pattern.permute.xlu0 0
      %377 = vperm.xlu0 %376, %v332
      %v378 = vpop.permute.xlu0 %377
      %381 = vset.pattern.permute.xlu0 0
      %382 = vperm.xlu0 %381, %v333
      %v383 = vpop.permute.xlu0 %382
      %386 = vset.pattern.permute.xlu0 0
      %387 = vperm.xlu0 %386, %v334
      %v388 = vpop.permute.xlu0 %387
      %391 = vset.pattern.permute.xlu0 0
      %392 = vperm.xlu0 %391, %v335
      %v393 = vpop.permute.xlu0 %392
      %396 = vset.pattern.permute.xlu0 0
      %397 = vperm.xlu0 %396, %v336
      %v398 = vpop.permute.xlu0 %397
      %401 = vset.pattern.permute.xlu0 0
      %402 = vperm.xlu0 %401, %v337
      %v403 = vpop.permute.xlu0 %402
      %406 = vset.pattern.permute.xlu0 0
      %407 = vperm.xlu0 %406, %v338
      %v408 = vpop.permute.xlu0 %407
      %411 = vset.pattern.permute.xlu0 0
      %412 = vperm.xlu0 %411, %v339
      %v413 = vpop.permute.xlu0 %412
      %416 = vset.pattern.permute.xlu0 0
      %417 = vperm.xlu0 %416, %v340
      %v418 = vpop.permute.xlu0 %417
      %421 = vset.pattern.permute.xlu0 0
      %422 = vperm.xlu0 %421, %v341
      %v423 = vpop.permute.xlu0 %422
      %v427 = vperm.slane %v343, 0
      %v428 = vperm.slane %v343, 4
      %v429 = vperm.slane %v344, 0
      %v433 = vperm.slane %v427, 0
      %v434 = vperm.slane %v428, 0
      %v435 = vperm.slane %v429, 0
      %v436 = vmul.f32 %v348, %v433
      %v437 = vmul.f32 %v348, %v434
      %v438 = vmul.f32 %v348, %v435
      %v439 = vmul.f32 %v353, %v433
      %v440 = vmul.f32 %v353, %v434
      %v441 = vmul.f32 %v353, %v435
      %v442 = vmul.f32 %v358, %v433
      %v443 = vmul.f32 %v358, %v434
      %v444 = vmul.f32 %v358, %v435
      %v445 = vmul.f32 %v363, %v433
      %v446 = vmul.f32 %v363, %v434
      %v447 = vmul.f32 %v363, %v435
      %v448 = vmul.f32 %v368, %v433
      %v449 = vmul.f32 %v368, %v434
      %v450 = vmul.f32 %v368, %v435
      %v451 = vmul.f32 %v373, %v433
      %v452 = vmul.f32 %v373, %v434
      %v453 = vmul.f32 %v373, %v435
      %v454 = vmul.f32 %v378, %v433
      %v455 = vmul.f32 %v378, %v434
      %v456 = vmul.f32 %v378, %v435
      %v457 = vmul.f32 %v383, %v433
      %v458 = vmul.f32 %v383, %v434
      %v459 = vmul.f32 %v383, %v435
      %v460 = vmul.f32 %v388, %v433
      %v461 = vmul.f32 %v388, %v434
      %v462 = vmul.f32 %v388, %v435
      %v463 = vmul.f32 %v393, %v433
      %v464 = vmul.f32 %v393, %v434
      %v465 = vmul.f32 %v393, %v435
      %v466 = vmul.f32 %v398, %v433
      %v467 = vmul.f32 %v398, %v434
      %v468 = vmul.f32 %v398, %v435
      %v469 = vmul.f32 %v403, %v433
      %v470 = vmul.f32 %v403, %v434
      %v471 = vmul.f32 %v403, %v435
      %v472 = vmul.f32 %v408, %v433
      %v473 = vmul.f32 %v408, %v434
      %v474 = vmul.f32 %v408, %v435
      %v475 = vmul.f32 %v413, %v433
      %v476 = vmul.f32 %v413, %v434
      %v477 = vmul.f32 %v413, %v435
      %v478 = vmul.f32 %v418, %v433
      %v479 = vmul.f32 %v418, %v434
      %v480 = vmul.f32 %v418, %v435
      %v481 = vmul.f32 %v423, %v433
      %v482 = vmul.f32 %v423, %v434
      %v483 = vmul.f32 %v423, %v435
      %484 = vset.pattern.permute.xlu0 1
      %485 = vperm.xlu0 %484, %v326
      %v486 = vpop.permute.xlu0 %485
      %488 = vset.pattern.permute.xlu0 1
      %489 = vperm.xlu0 %488, %v327
      %v490 = vpop.permute.xlu0 %489
      %492 = vset.pattern.permute.xlu0 1
      %493 = vperm.xlu0 %492, %v328
      %v494 = vpop.permute.xlu0 %493
      %496 = vset.pattern.permute.xlu0 1
      %497 = vperm.xlu0 %496, %v329
      %v498 = vpop.permute.xlu0 %497
      %500 = vset.pattern.permute.xlu0 1
      %501 = vperm.xlu0 %500, %v330
      %v502 = vpop.permute.xlu0 %501
      %504 = vset.pattern.permute.xlu0 1
      %505 = vperm.xlu0 %504, %v331
      %v506 = vpop.permute.xlu0 %505
      %508 = vset.pattern.permute.xlu0 1
      %509 = vperm.xlu0 %508, %v332
      %v510 = vpop.permute.xlu0 %509
      %512 = vset.pattern.permute.xlu0 1
      %513 = vperm.xlu0 %512, %v333
      %v514 = vpop.permute.xlu0 %513
      %516 = vset.pattern.permute.xlu0 1
      %517 = vperm.xlu0 %516, %v334
      %v518 = vpop.permute.xlu0 %517
      %520 = vset.pattern.permute.xlu0 1
      %521 = vperm.xlu0 %520, %v335
      %v522 = vpop.permute.xlu0 %521
      %524 = vset.pattern.permute.xlu0 1
      %525 = vperm.xlu0 %524, %v336
      %v526 = vpop.permute.xlu0 %525
      %528 = vset.pattern.permute.xlu0 1
      %529 = vperm.xlu0 %528, %v337
      %v530 = vpop.permute.xlu0 %529
      %532 = vset.pattern.permute.xlu0 1
      %533 = vperm.xlu0 %532, %v338
      %v534 = vpop.permute.xlu0 %533
      %536 = vset.pattern.permute.xlu0 1
      %537 = vperm.xlu0 %536, %v339
      %v538 = vpop.permute.xlu0 %537
      %540 = vset.pattern.permute.xlu0 1
      %541 = vperm.xlu0 %540, %v340
      %v542 = vpop.permute.xlu0 %541
      %544 = vset.pattern.permute.xlu0 1
      %545 = vperm.xlu0 %544, %v341
      %v546 = vpop.permute.xlu0 %545
      %v548 = vperm.slane %v343, 1
      %v549 = vperm.slane %v343, 5
      %v550 = vperm.slane %v344, 1
      %v554 = vperm.slane %v548, 1
      %v555 = vperm.slane %v549, 1
      %v556 = vperm.slane %v550, 1
      %v557 = vmul.f32 %v486, %v554
      %v558 = vmul.f32 %v486, %v555
      %v559 = vmul.f32 %v486, %v556
      %v560 = vmul.f32 %v490, %v554
      %v561 = vmul.f32 %v490, %v555
      %v562 = vmul.f32 %v490, %v556
      %v563 = vmul.f32 %v494, %v554
      %v564 = vmul.f32 %v494, %v555
      %v565 = vmul.f32 %v494, %v556
      %v566 = vmul.f32 %v498, %v554
      %v567 = vmul.f32 %v498, %v555
      %v568 = vmul.f32 %v498, %v556
      %v569 = vmul.f32 %v502, %v554
      %v570 = vmul.f32 %v502, %v555
      %v571 = vmul.f32 %v502, %v556
      %v572 = vmul.f32 %v506, %v554
      %v573 = vmul.f32 %v506, %v555
      %v574 = vmul.f32 %v506, %v556
      %v575 = vmul.f32 %v510, %v554
      %v576 = vmul.f32 %v510, %v555
      %v577 = vmul.f32 %v510, %v556
      %v578 = vmul.f32 %v514, %v554
      %v579 = vmul.f32 %v514, %v555
      %v580 = vmul.f32 %v514, %v556
      %v581 = vmul.f32 %v518, %v554
      %v582 = vmul.f32 %v518, %v555
      %v583 = vmul.f32 %v518, %v556
      %v584 = vmul.f32 %v522, %v554
      %v585 = vmul.f32 %v522, %v555
      %v586 = vmul.f32 %v522, %v556
      %v587 = vmul.f32 %v526, %v554
      %v588 = vmul.f32 %v526, %v555
      %v589 = vmul.f32 %v526, %v556
      %v590 = vmul.f32 %v530, %v554
      %v591 = vmul.f32 %v530, %v555
      %v592 = vmul.f32 %v530, %v556
      %v593 = vmul.f32 %v534, %v554
      %v594 = vmul.f32 %v534, %v555
      %v595 = vmul.f32 %v534, %v556
      %v596 = vmul.f32 %v538, %v554
      %v597 = vmul.f32 %v538, %v555
      %v598 = vmul.f32 %v538, %v556
      %v599 = vmul.f32 %v542, %v554
      %v600 = vmul.f32 %v542, %v555
      %v601 = vmul.f32 %v542, %v556
      %v602 = vmul.f32 %v546, %v554
      %v603 = vmul.f32 %v546, %v555
      %v604 = vmul.f32 %v546, %v556
      %v605 = vadd.f32 %v436, %v557
      %v606 = vadd.f32 %v437, %v558
      %v607 = vadd.f32 %v438, %v559
      %v608 = vadd.f32 %v439, %v560
      %v609 = vadd.f32 %v440, %v561
      %v610 = vadd.f32 %v441, %v562
      %v611 = vadd.f32 %v442, %v563
      %v612 = vadd.f32 %v443, %v564
      %v613 = vadd.f32 %v444, %v565
      %v614 = vadd.f32 %v445, %v566
      %v615 = vadd.f32 %v446, %v567
      %v616 = vadd.f32 %v447, %v568
      %v617 = vadd.f32 %v448, %v569
      %v618 = vadd.f32 %v449, %v570
      %v619 = vadd.f32 %v450, %v571
      %v620 = vadd.f32 %v451, %v572
      %v621 = vadd.f32 %v452, %v573
      %v622 = vadd.f32 %v453, %v574
      %v623 = vadd.f32 %v454, %v575
      %v624 = vadd.f32 %v455, %v576
      %v625 = vadd.f32 %v456, %v577
      %v626 = vadd.f32 %v457, %v578
      %v627 = vadd.f32 %v458, %v579
      %v628 = vadd.f32 %v459, %v580
      %v629 = vadd.f32 %v460, %v581
      %v630 = vadd.f32 %v461, %v582
      %v631 = vadd.f32 %v462, %v583
      %v632 = vadd.f32 %v463, %v584
      %v633 = vadd.f32 %v464, %v585
      %v634 = vadd.f32 %v465, %v586
      %v635 = vadd.f32 %v466, %v587
      %v636 = vadd.f32 %v467, %v588
      %v637 = vadd.f32 %v468, %v589
      %v638 = vadd.f32 %v469, %v590
      %v639 = vadd.f32 %v470, %v591
      %v640 = vadd.f32 %v471, %v592
      %v641 = vadd.f32 %v472, %v593
      %v642 = vadd.f32 %v473, %v594
      %v643 = vadd.f32 %v474, %v595
      %v644 = vadd.f32 %v475, %v596
      %v645 = vadd.f32 %v476, %v597
      %v646 = vadd.f32 %v477, %v598
      %v647 = vadd.f32 %v478, %v599
      %v648 = vadd.f32 %v479, %v600
      %v649 = vadd.f32 %v480, %v601
      %v650 = vadd.f32 %v481, %v602
      %v651 = vadd.f32 %v482, %v603
      %v652 = vadd.f32 %v483, %v604
      %653 = vset.pattern.permute.xlu0 2
      %654 = vperm.xlu0 %653, %v326
      %v655 = vpop.permute.xlu0 %654
      %657 = vset.pattern.permute.xlu0 2
      %658 = vperm.xlu0 %657, %v327
      %v659 = vpop.permute.xlu0 %658
      %661 = vset.pattern.permute.xlu0 2
      %662 = vperm.xlu0 %661, %v328
      %v663 = vpop.permute.xlu0 %662
      %665 = vset.pattern.permute.xlu0 2
      %666 = vperm.xlu0 %665, %v329
      %v667 = vpop.permute.xlu0 %666
      %669 = vset.pattern.permute.xlu0 2
      %670 = vperm.xlu0 %669, %v330
      %v671 = vpop.permute.xlu0 %670
      %673 = vset.pattern.permute.xlu0 2
      %674 = vperm.xlu0 %673, %v331
      %v675 = vpop.permute.xlu0 %674
      %677 = vset.pattern.permute.xlu0 2
      %678 = vperm.xlu0 %677, %v332
      %v679 = vpop.permute.xlu0 %678
      %681 = vset.pattern.permute.xlu0 2
      %682 = vperm.xlu0 %681, %v333
      %v683 = vpop.permute.xlu0 %682
      %685 = vset.pattern.permute.xlu0 2
      %686 = vperm.xlu0 %685, %v334
      %v687 = vpop.permute.xlu0 %686
      %689 = vset.pattern.permute.xlu0 2
      %690 = vperm.xlu0 %689, %v335
      %v691 = vpop.permute.xlu0 %690
      %693 = vset.pattern.permute.xlu0 2
      %694 = vperm.xlu0 %693, %v336
      %v695 = vpop.permute.xlu0 %694
      %697 = vset.pattern.permute.xlu0 2
      %698 = vperm.xlu0 %697, %v337
      %v699 = vpop.permute.xlu0 %698
      %701 = vset.pattern.permute.xlu0 2
      %702 = vperm.xlu0 %701, %v338
      %v703 = vpop.permute.xlu0 %702
      %705 = vset.pattern.permute.xlu0 2
      %706 = vperm.xlu0 %705, %v339
      %v707 = vpop.permute.xlu0 %706
      %709 = vset.pattern.permute.xlu0 2
      %710 = vperm.xlu0 %709, %v340
      %v711 = vpop.permute.xlu0 %710
      %713 = vset.pattern.permute.xlu0 2
      %714 = vperm.xlu0 %713, %v341
      %v715 = vpop.permute.xlu0 %714
      %v717 = vperm.slane %v343, 2
      %v718 = vperm.slane %v343, 6
      %v719 = vperm.slane %v344, 2
      %v723 = vperm.slane %v717, 2
      %v724 = vperm.slane %v718, 2
      %v725 = vperm.slane %v719, 2
      %v726 = vmul.f32 %v655, %v723
      %v727 = vmul.f32 %v655, %v724
      %v728 = vmul.f32 %v655, %v725
      %v729 = vmul.f32 %v659, %v723
      %v730 = vmul.f32 %v659, %v724
      %v731 = vmul.f32 %v659, %v725
      %v732 = vmul.f32 %v663, %v723
      %v733 = vmul.f32 %v663, %v724
      %v734 = vmul.f32 %v663, %v725
      %v735 = vmul.f32 %v667, %v723
      %v736 = vmul.f32 %v667, %v724
      %v737 = vmul.f32 %v667, %v725
      %v738 = vmul.f32 %v671, %v723
      %v739 = vmul.f32 %v671, %v724
      %v740 = vmul.f32 %v671, %v725
      %v741 = vmul.f32 %v675, %v723
      %v742 = vmul.f32 %v675, %v724
      %v743 = vmul.f32 %v675, %v725
      %v744 = vmul.f32 %v679, %v723
      %v745 = vmul.f32 %v679, %v724
      %v746 = vmul.f32 %v679, %v725
      %v747 = vmul.f32 %v683, %v723
      %v748 = vmul.f32 %v683, %v724
      %v749 = vmul.f32 %v683, %v725
      %v750 = vmul.f32 %v687, %v723
      %v751 = vmul.f32 %v687, %v724
      %v752 = vmul.f32 %v687, %v725
      %v753 = vmul.f32 %v691, %v723
      %v754 = vmul.f32 %v691, %v724
      %v755 = vmul.f32 %v691, %v725
      %v756 = vmul.f32 %v695, %v723
      %v757 = vmul.f32 %v695, %v724
      %v758 = vmul.f32 %v695, %v725
      %v759 = vmul.f32 %v699, %v723
      %v760 = vmul.f32 %v699, %v724
      %v761 = vmul.f32 %v699, %v725
      %v762 = vmul.f32 %v703, %v723
      %v763 = vmul.f32 %v703, %v724
      %v764 = vmul.f32 %v703, %v725
      %v765 = vmul.f32 %v707, %v723
      %v766 = vmul.f32 %v707, %v724
      %v767 = vmul.f32 %v707, %v725
      %v768 = vmul.f32 %v711, %v723
      %v769 = vmul.f32 %v711, %v724
      %v770 = vmul.f32 %v711, %v725
      %v771 = vmul.f32 %v715, %v723
      %v772 = vmul.f32 %v715, %v724
      %v773 = vmul.f32 %v715, %v725
      %v774 = vadd.f32 %v605, %v726
      %v775 = vadd.f32 %v606, %v727
      %v776 = vadd.f32 %v607, %v728
      %v777 = vadd.f32 %v608, %v729
      %v778 = vadd.f32 %v609, %v730
      %v779 = vadd.f32 %v610, %v731
      %v780 = vadd.f32 %v611, %v732
      %v781 = vadd.f32 %v612, %v733
      %v782 = vadd.f32 %v613, %v734
      %v783 = vadd.f32 %v614, %v735
      %v784 = vadd.f32 %v615, %v736
      %v785 = vadd.f32 %v616, %v737
      %v786 = vadd.f32 %v617, %v738
      %v787 = vadd.f32 %v618, %v739
      %v788 = vadd.f32 %v619, %v740
      %v789 = vadd.f32 %v620, %v741
      %v790 = vadd.f32 %v621, %v742
      %v791 = vadd.f32 %v622, %v743
      %v792 = vadd.f32 %v623, %v744
      %v793 = vadd.f32 %v624, %v745
      %v794 = vadd.f32 %v625, %v746
      %v795 = vadd.f32 %v626, %v747
      %v796 = vadd.f32 %v627, %v748
      %v797 = vadd.f32 %v628, %v749
      %v798 = vadd.f32 %v629, %v750
      %v799 = vadd.f32 %v630, %v751
      %v800 = vadd.f32 %v631, %v752
      %v801 = vadd.f32 %v632, %v753
      %v802 = vadd.f32 %v633, %v754
      %v803 = vadd.f32 %v634, %v755
      %v804 = vadd.f32 %v635, %v756
      %v805 = vadd.f32 %v636, %v757
      %v806 = vadd.f32 %v637, %v758
      %v807 = vadd.f32 %v638, %v759
      %v808 = vadd.f32 %v639, %v760
      %v809 = vadd.f32 %v640, %v761
      %v810 = vadd.f32 %v641, %v762
      %v811 = vadd.f32 %v642, %v763
      %v812 = vadd.f32 %v643, %v764
      %v813 = vadd.f32 %v644, %v765
      %v814 = vadd.f32 %v645, %v766
      %v815 = vadd.f32 %v646, %v767
      %v816 = vadd.f32 %v647, %v768
      %v817 = vadd.f32 %v648, %v769
      %v818 = vadd.f32 %v649, %v770
      %v819 = vadd.f32 %v650, %v771
      %v820 = vadd.f32 %v651, %v772
      %v821 = vadd.f32 %v652, %v773
      %822 = vset.pattern.permute.xlu0 3
      %823 = vperm.xlu0 %822, %v326
      %v824 = vpop.permute.xlu0 %823
      %826 = vset.pattern.permute.xlu0 3
      %827 = vperm.xlu0 %826, %v327
      %v828 = vpop.permute.xlu0 %827
      %830 = vset.pattern.permute.xlu0 3
      %831 = vperm.xlu0 %830, %v328
      %v832 = vpop.permute.xlu0 %831
      %834 = vset.pattern.permute.xlu0 3
      %835 = vperm.xlu0 %834, %v329
      %v836 = vpop.permute.xlu0 %835
      %838 = vset.pattern.permute.xlu0 3
      %839 = vperm.xlu0 %838, %v330
      %v840 = vpop.permute.xlu0 %839
      %842 = vset.pattern.permute.xlu0 3
      %843 = vperm.xlu0 %842, %v331
      %v844 = vpop.permute.xlu0 %843
      %846 = vset.pattern.permute.xlu0 3
      %847 = vperm.xlu0 %846, %v332
      %v848 = vpop.permute.xlu0 %847
      %850 = vset.pattern.permute.xlu0 3
      %851 = vperm.xlu0 %850, %v333
      %v852 = vpop.permute.xlu0 %851
      %854 = vset.pattern.permute.xlu0 3
      %855 = vperm.xlu0 %854, %v334
      %v856 = vpop.permute.xlu0 %855
      %858 = vset.pattern.permute.xlu0 3
      %859 = vperm.xlu0 %858, %v335
      %v860 = vpop.permute.xlu0 %859
      %862 = vset.pattern.permute.xlu0 3
      %863 = vperm.xlu0 %862, %v336
      %v864 = vpop.permute.xlu0 %863
      %866 = vset.pattern.permute.xlu0 3
      %867 = vperm.xlu0 %866, %v337
      %v868 = vpop.permute.xlu0 %867
      %870 = vset.pattern.permute.xlu0 3
      %871 = vperm.xlu0 %870, %v338
      %v872 = vpop.permute.xlu0 %871
      %874 = vset.pattern.permute.xlu0 3
      %875 = vperm.xlu0 %874, %v339
      %v876 = vpop.permute.xlu0 %875
      %878 = vset.pattern.permute.xlu0 3
      %879 = vperm.xlu0 %878, %v340
      %v880 = vpop.permute.xlu0 %879
      %882 = vset.pattern.permute.xlu0 3
      %883 = vperm.xlu0 %882, %v341
      %v884 = vpop.permute.xlu0 %883
      %v886 = vperm.slane %v343, 3
      %v887 = vperm.slane %v343, 7
      %v888 = vperm.slane %v344, 3
      %v892 = vperm.slane %v886, 3
      %v893 = vperm.slane %v887, 3
      %v894 = vperm.slane %v888, 3
      %v895 = vmul.f32 %v824, %v892
      %v896 = vmul.f32 %v824, %v893
      %v897 = vmul.f32 %v824, %v894
      %v898 = vmul.f32 %v828, %v892
      %v899 = vmul.f32 %v828, %v893
      %v900 = vmul.f32 %v828, %v894
      %v901 = vmul.f32 %v832, %v892
      %v902 = vmul.f32 %v832, %v893
      %v903 = vmul.f32 %v832, %v894
      %v904 = vmul.f32 %v836, %v892
      %v905 = vmul.f32 %v836, %v893
      %v906 = vmul.f32 %v836, %v894
      %v907 = vmul.f32 %v840, %v892
      %v908 = vmul.f32 %v840, %v893
      %v909 = vmul.f32 %v840, %v894
      %v910 = vmul.f32 %v844, %v892
      %v911 = vmul.f32 %v844, %v893
      %v912 = vmul.f32 %v844, %v894
      %v913 = vmul.f32 %v848, %v892
      %v914 = vmul.f32 %v848, %v893
      %v915 = vmul.f32 %v848, %v894
      %v916 = vmul.f32 %v852, %v892
      %v917 = vmul.f32 %v852, %v893
      %v918 = vmul.f32 %v852, %v894
      %v919 = vmul.f32 %v856, %v892
      %v920 = vmul.f32 %v856, %v893
      %v921 = vmul.f32 %v856, %v894
      %v922 = vmul.f32 %v860, %v892
      %v923 = vmul.f32 %v860, %v893
      %v924 = vmul.f32 %v860, %v894
      %v925 = vmul.f32 %v864, %v892
      %v926 = vmul.f32 %v864, %v893
      %v927 = vmul.f32 %v864, %v894
      %v928 = vmul.f32 %v868, %v892
      %v929 = vmul.f32 %v868, %v893
      %v930 = vmul.f32 %v868, %v894
      %v931 = vmul.f32 %v872, %v892
      %v932 = vmul.f32 %v872, %v893
      %v933 = vmul.f32 %v872, %v894
      %v934 = vmul.f32 %v876, %v892
      %v935 = vmul.f32 %v876, %v893
      %v936 = vmul.f32 %v876, %v894
      %v937 = vmul.f32 %v880, %v892
      %v938 = vmul.f32 %v880, %v893
      %v939 = vmul.f32 %v880, %v894
      %v940 = vmul.f32 %v884, %v892
      %v941 = vmul.f32 %v884, %v893
      %v942 = vmul.f32 %v884, %v894
      %v943 = vadd.f32 %v774, %v895
      %v944 = vadd.f32 %v775, %v896
      %v945 = vadd.f32 %v776, %v897
      %v946 = vadd.f32 %v777, %v898
      %v947 = vadd.f32 %v778, %v899
      %v948 = vadd.f32 %v779, %v900
      %v949 = vadd.f32 %v780, %v901
      %v950 = vadd.f32 %v781, %v902
      %v951 = vadd.f32 %v782, %v903
      %v952 = vadd.f32 %v783, %v904
      %v953 = vadd.f32 %v784, %v905
      %v954 = vadd.f32 %v785, %v906
      %v955 = vadd.f32 %v786, %v907
      %v956 = vadd.f32 %v787, %v908
      %v957 = vadd.f32 %v788, %v909
      %v958 = vadd.f32 %v789, %v910
      %v959 = vadd.f32 %v790, %v911
      %v960 = vadd.f32 %v791, %v912
      %v961 = vadd.f32 %v792, %v913
      %v962 = vadd.f32 %v793, %v914
      %v963 = vadd.f32 %v794, %v915
      %v964 = vadd.f32 %v795, %v916
      %v965 = vadd.f32 %v796, %v917
      %v966 = vadd.f32 %v797, %v918
      %v967 = vadd.f32 %v798, %v919
      %v968 = vadd.f32 %v799, %v920
      %v969 = vadd.f32 %v800, %v921
      %v970 = vadd.f32 %v801, %v922
      %v971 = vadd.f32 %v802, %v923
      %v972 = vadd.f32 %v803, %v924
      %v973 = vadd.f32 %v804, %v925
      %v974 = vadd.f32 %v805, %v926
      %v975 = vadd.f32 %v806, %v927
      %v976 = vadd.f32 %v807, %v928
      %v977 = vadd.f32 %v808, %v929
      %v978 = vadd.f32 %v809, %v930
      %v979 = vadd.f32 %v810, %v931
      %v980 = vadd.f32 %v811, %v932
      %v981 = vadd.f32 %v812, %v933
      %v982 = vadd.f32 %v813, %v934
      %v983 = vadd.f32 %v814, %v935
      %v984 = vadd.f32 %v815, %v936
      %v985 = vadd.f32 %v816, %v937
      %v986 = vadd.f32 %v817, %v938
      %v987 = vadd.f32 %v818, %v939
      %v988 = vadd.f32 %v819, %v940
      %v989 = vadd.f32 %v820, %v941
      %v990 = vadd.f32 %v821, %v942
      %v991 = vmax.f32 %v943, 0.0
      %v992 = vmax.f32 %v944, 0.0
      %v993 = vmax.f32 %v945, 0.0
      %v994 = vmax.f32 %v946, 0.0
      %v995 = vmax.f32 %v947, 0.0
      %v996 = vmax.f32 %v948, 0.0
      %v997 = vmax.f32 %v949, 0.0
      %v998 = vmax.f32 %v950, 0.0
      %v999 = vmax.f32 %v951, 0.0
      %v1000 = vmax.f32 %v952, 0.0
      %v1001 = vmax.f32 %v953, 0.0
      %v1002 = vmax.f32 %v954, 0.0
      %v1003 = vmax.f32 %v955, 0.0
      %v1004 = vmax.f32 %v956, 0.0
      %v1005 = vmax.f32 %v957, 0.0
      %v1006 = vmax.f32 %v958, 0.0
      %v1007 = vmax.f32 %v959, 0.0
      %v1008 = vmax.f32 %v960, 0.0
      %v1009 = vmax.f32 %v961, 0.0
      %v1010 = vmax.f32 %v962, 0.0
      %v1011 = vmax.f32 %v963, 0.0
      %v1012 = vmax.f32 %v964, 0.0
      %v1013 = vmax.f32 %v965, 0.0
      %v1014 = vmax.f32 %v966, 0.0
      %v1015 = vmax.f32 %v967, 0.0
      %v1016 = vmax.f32 %v968, 0.0
      %v1017 = vmax.f32 %v969, 0.0
      %v1018 = vmax.f32 %v970, 0.0
      %v1019 = vmax.f32 %v971, 0.0
      %v1020 = vmax.f32 %v972, 0.0
      %v1021 = vmax.f32 %v973, 0.0
      %v1022 = vmax.f32 %v974, 0.0
      %v1023 = vmax.f32 %v975, 0.0
      %v1024 = vmax.f32 %v976, 0.0
      %v1025 = vmax.f32 %v977, 0.0
      %v1026 = vmax.f32 %v978, 0.0
      %v1027 = vmax.f32 %v979, 0.0
      %v1028 = vmax.f32 %v980, 0.0
      %v1029 = vmax.f32 %v981, 0.0
      %v1030 = vmax.f32 %v982, 0.0
      %v1031 = vmax.f32 %v983, 0.0
      %v1032 = vmax.f32 %v984, 0.0
      %v1033 = vmax.f32 %v985, 0.0
      %v1034 = vmax.f32 %v986, 0.0
      %v1035 = vmax.f32 %v987, 0.0
      %v1036 = vmax.f32 %v988, 0.0
      %v1037 = vmax.f32 %v989, 0.0
      %v1038 = vmax.f32 %v990, 0.0
      %v1039 = vadd.f32 %v991, %v992
      %v1040 = vadd.f32 %v1039, %v993
      %1041 = vadd.xlane.f32.xlu0 %v1040
      %v1042 = vpop.xlane.xlu0 %1041
      %v1043 = vadd.f32 %v994, %v995
      %v1044 = vadd.f32 %v1043, %v996
      %1045 = vadd.xlane.f32.xlu0 %v1044
      %v1046 = vpop.xlane.xlu0 %1045
      %v1047 = vadd.f32 %v997, %v998
      %v1048 = vadd.f32 %v1047, %v999
      %1049 = vadd.xlane.f32.xlu0 %v1048
      %v1050 = vpop.xlane.xlu0 %1049
      %v1051 = vadd.f32 %v1000, %v1001
      %v1052 = vadd.f32 %v1051, %v1002
      %1053 = vadd.xlane.f32.xlu0 %v1052
      %v1054 = vpop.xlane.xlu0 %1053
      %v1055 = vadd.f32 %v1003, %v1004
      %v1056 = vadd.f32 %v1055, %v1005
      %1057 = vadd.xlane.f32.xlu0 %v1056
      %v1058 = vpop.xlane.xlu0 %1057
      %v1059 = vadd.f32 %v1006, %v1007
      %v1060 = vadd.f32 %v1059, %v1008
      %1061 = vadd.xlane.f32.xlu0 %v1060
      %v1062 = vpop.xlane.xlu0 %1061
      %v1063 = vadd.f32 %v1009, %v1010
      %v1064 = vadd.f32 %v1063, %v1011
      %1065 = vadd.xlane.f32.xlu0 %v1064
      %v1066 = vpop.xlane.xlu0 %1065
      %v1067 = vadd.f32 %v1012, %v1013
      %v1068 = vadd.f32 %v1067, %v1014
      %1069 = vadd.xlane.f32.xlu0 %v1068
      %v1070 = vpop.xlane.xlu0 %1069
      %v1071 = vadd.f32 %v1015, %v1016
      %v1072 = vadd.f32 %v1071, %v1017
      %1073 = vadd.xlane.f32.xlu0 %v1072
      %v1074 = vpop.xlane.xlu0 %1073
      %v1075 = vadd.f32 %v1018, %v1019
      %v1076 = vadd.f32 %v1075, %v1020
      %1077 = vadd.xlane.f32.xlu0 %v1076
      %v1078 = vpop.xlane.xlu0 %1077
      %v1079 = vadd.f32 %v1021, %v1022
      %v1080 = vadd.f32 %v1079, %v1023
      %1081 = vadd.xlane.f32.xlu0 %v1080
      %v1082 = vpop.xlane.xlu0 %1081
      %v1083 = vadd.f32 %v1024, %v1025
      %v1084 = vadd.f32 %v1083, %v1026
      %1085 = vadd.xlane.f32.xlu0 %v1084
      %v1086 = vpop.xlane.xlu0 %1085
      %v1087 = vadd.f32 %v1027, %v1028
      %v1088 = vadd.f32 %v1087, %v1029
      %1089 = vadd.xlane.f32.xlu0 %v1088
      %v1090 = vpop.xlane.xlu0 %1089
      %v1091 = vadd.f32 %v1030, %v1031
      %v1092 = vadd.f32 %v1091, %v1032
      %1093 = vadd.xlane.f32.xlu0 %v1092
      %v1094 = vpop.xlane.xlu0 %1093
      %v1095 = vadd.f32 %v1033, %v1034
      %v1096 = vadd.f32 %v1095, %v1035
      %1097 = vadd.xlane.f32.xlu0 %v1096
      %v1098 = vpop.xlane.xlu0 %1097
      %v1099 = vadd.f32 %v1036, %v1037
      %v1100 = vadd.f32 %v1099, %v1038
      %1101 = vadd.xlane.f32.xlu0 %v1100
      %v1102 = vpop.xlane.xlu0 %1101
      %v1103 = vld [vmem:[%s286] sm:$0xf]
      %v1104 = vld [vmem:[%s286 + $0x4] sm:$0xf]
      %v1105 = vld [vmem:[%s286 + $0x8] sm:$0xf]
      %v1106 = vld [vmem:[%s286 + $0xc] sm:$0xf]
      %v1107 = vld [vmem:[%s286 + $0x10] sm:$0xf]
      %v1108 = vld [vmem:[%s286 + $0x14] sm:$0xf]
      %v1109 = vld [vmem:[%s286 + $0x18] sm:$0xf]
      %v1110 = vld [vmem:[%s286 + $0x1c] sm:$0xf]
      %v1111 = vld [vmem:[%s286 + $0x20] sm:$0xf]
      %v1112 = vld [vmem:[%s286 + $0x24] sm:$0xf]
      %v1113 = vld [vmem:[%s286 + $0x28] sm:$0xf]
      %v1114 = vld [vmem:[%s286 + $0x2c] sm:$0xf]
      %v1115 = vld [vmem:[%s286 + $0x30] sm:$0xf]
      %v1116 = vld [vmem:[%s286 + $0x34] sm:$0xf]
      %v1117 = vld [vmem:[%s286 + $0x38] sm:$0xf]
      %v1118 = vld [vmem:[%s286 + $0x3c] sm:$0xf]
      %v1119 = vld [vmem:[%s286 + $0x40] sm:$0xf]
      %v1120 = vld [vmem:[%s286 + $0x44] sm:$0xf]
      %v1121 = vld [vmem:[%s286 + $0x48] sm:$0xf]
      %v1122 = vld [vmem:[%s286 + $0x4c] sm:$0xf]
      %v1123 = vld [vmem:[%s286 + $0x50] sm:$0xf]
      %v1124 = vld [vmem:[%s286 + $0x54] sm:$0xf]
      %v1125 = vld [vmem:[%s286 + $0x58] sm:$0xf]
      %v1126 = vld [vmem:[%s286 + $0x5c] sm:$0xf]
      %v1127 = vld [vmem:[%s286 + $0x60] sm:$0xf]
      %v1128 = vld [vmem:[%s286 + $0x64] sm:$0xf]
      %v1129 = vld [vmem:[%s286 + $0x68] sm:$0xf]
      %v1130 = vld [vmem:[%s286 + $0x6c] sm:$0xf]
      %v1131 = vld [vmem:[%s286 + $0x70] sm:$0xf]
      %v1132 = vld [vmem:[%s286 + $0x74] sm:$0xf]
      %v1133 = vld [vmem:[%s286 + $0x78] sm:$0xf]
      %v1134 = vld [vmem:[%s286 + $0x7c] sm:$0xf]
      %v1135 = vld [vmem:[%s286 + $0x80] sm:$0xf]
      %v1136 = vld [vmem:[%s286 + $0x84] sm:$0xf]
      %v1137 = vld [vmem:[%s286 + $0x88] sm:$0xf]
      %v1138 = vld [vmem:[%s286 + $0x8c] sm:$0xf]
      %v1139 = vld [vmem:[%s286 + $0x90] sm:$0xf]
      %v1140 = vld [vmem:[%s286 + $0x94] sm:$0xf]
      %v1141 = vld [vmem:[%s286 + $0x98] sm:$0xf]
      %v1142 = vld [vmem:[%s286 + $0x9c] sm:$0xf]
      %v1143 = vld [vmem:[%s286 + $0xa0] sm:$0xf]
      %v1144 = vld [vmem:[%s286 + $0xa4] sm:$0xf]
      %v1145 = vld [vmem:[%s286 + $0xa8] sm:$0xf]
      %v1146 = vld [vmem:[%s286 + $0xac] sm:$0xf]
      %v1147 = vld [vmem:[%s286 + $0xb0] sm:$0xf]
      %v1148 = vld [vmem:[%s286 + $0xb4] sm:$0xf]
      %v1149 = vld [vmem:[%s286 + $0xb8] sm:$0xf]
      %v1150 = vld [vmem:[%s286 + $0xbc] sm:$0xf]
      %v1151 = vpack.c.bf16 %v994, %v991
      %v1152 = vpack.c.bf16 %v995, %v992
      %v1153 = vpack.c.bf16 %v996, %v993
      %v1154 = vpack.c.bf16 %v1000, %v997
      %v1155 = vpack.c.bf16 %v1001, %v998
      %v1156 = vpack.c.bf16 %v1002, %v999
      %v1157 = vpack.c.bf16 %v1006, %v1003
      %v1158 = vpack.c.bf16 %v1007, %v1004
      %v1159 = vpack.c.bf16 %v1008, %v1005
      %v1160 = vpack.c.bf16 %v1012, %v1009
      %v1161 = vpack.c.bf16 %v1013, %v1010
      %v1162 = vpack.c.bf16 %v1014, %v1011
      %v1163 = vpack.c.bf16 %v1018, %v1015
      %v1164 = vpack.c.bf16 %v1019, %v1016
      %v1165 = vpack.c.bf16 %v1020, %v1017
      %v1166 = vpack.c.bf16 %v1024, %v1021
      %v1167 = vpack.c.bf16 %v1025, %v1022
      %v1168 = vpack.c.bf16 %v1026, %v1023
      %v1169 = vpack.c.bf16 %v1030, %v1027
      %v1170 = vpack.c.bf16 %v1031, %v1028
      %v1171 = vpack.c.bf16 %v1032, %v1029
      %v1172 = vpack.c.bf16 %v1036, %v1033
      %v1173 = vpack.c.bf16 %v1037, %v1034
      %v1174 = vpack.c.bf16 %v1038, %v1035
      %v1223 = vunpack.c.l.b16 %v1103
      %v1224 = vunpack.c.l.b16 %v1104
      %v1225 = vunpack.c.l.b16 %v1105
      %v1226 = vunpack.c.l.b16 %v1106
      %v1227 = vunpack.c.l.b16 %v1107
      %v1228 = vunpack.c.l.b16 %v1108
      %v1229 = vunpack.c.l.b16 %v1109
      %v1230 = vunpack.c.l.b16 %v1110
      %v1231 = vunpack.c.l.b16 %v1111
      %v1232 = vunpack.c.l.b16 %v1112
      %v1233 = vunpack.c.l.b16 %v1113
      %v1234 = vunpack.c.l.b16 %v1114
      %v1235 = vunpack.c.l.b16 %v1115
      %v1236 = vunpack.c.l.b16 %v1116
      %v1237 = vunpack.c.l.b16 %v1117
      %v1238 = vunpack.c.l.b16 %v1118
      %v1239 = vunpack.c.l.b16 %v1119
      %v1240 = vunpack.c.l.b16 %v1120
      %v1241 = vunpack.c.l.b16 %v1121
      %v1242 = vunpack.c.l.b16 %v1122
      %v1243 = vunpack.c.l.b16 %v1123
      %v1244 = vunpack.c.l.b16 %v1124
      %v1245 = vunpack.c.l.b16 %v1125
      %v1246 = vunpack.c.l.b16 %v1126
      %v1247 = vunpack.c.l.b16 %v1127
      %v1248 = vunpack.c.l.b16 %v1128
      %v1249 = vunpack.c.l.b16 %v1129
      %v1250 = vunpack.c.l.b16 %v1130
      %v1251 = vunpack.c.l.b16 %v1131
      %v1252 = vunpack.c.l.b16 %v1132
      %v1253 = vunpack.c.l.b16 %v1133
      %v1254 = vunpack.c.l.b16 %v1134
      %v1255 = vunpack.c.l.b16 %v1135
      %v1256 = vunpack.c.l.b16 %v1136
      %v1257 = vunpack.c.l.b16 %v1137
      %v1258 = vunpack.c.l.b16 %v1138
      %v1259 = vunpack.c.l.b16 %v1139
      %v1260 = vunpack.c.l.b16 %v1140
      %v1261 = vunpack.c.l.b16 %v1141
      %v1262 = vunpack.c.l.b16 %v1142
      %v1263 = vunpack.c.l.b16 %v1143
      %v1264 = vunpack.c.l.b16 %v1144
      %v1265 = vunpack.c.l.b16 %v1145
      %v1266 = vunpack.c.l.b16 %v1146
      %v1267 = vunpack.c.l.b16 %v1147
      %v1268 = vunpack.c.l.b16 %v1148
      %v1269 = vunpack.c.l.b16 %v1149
      %v1270 = vunpack.c.l.b16 %v1150
      %v1271 = vpack.c.b16 %v1224, %v1223
      %v1272 = vpack.c.b16 %v1226, %v1225
      %v1273 = vpack.c.b16 %v1228, %v1227
      %v1274 = vpack.c.b16 %v1230, %v1229
      %v1275 = vpack.c.b16 %v1232, %v1231
      %v1276 = vpack.c.b16 %v1234, %v1233
      %v1277 = vpack.c.b16 %v1236, %v1235
      %v1278 = vpack.c.b16 %v1238, %v1237
      %v1279 = vpack.c.b16 %v1240, %v1239
      %v1280 = vpack.c.b16 %v1242, %v1241
      %v1281 = vpack.c.b16 %v1244, %v1243
      %v1282 = vpack.c.b16 %v1246, %v1245
      %v1283 = vpack.c.b16 %v1248, %v1247
      %v1284 = vpack.c.b16 %v1250, %v1249
      %v1285 = vpack.c.b16 %v1252, %v1251
      %v1286 = vpack.c.b16 %v1254, %v1253
      %v1287 = vpack.c.b16 %v1256, %v1255
      %v1288 = vpack.c.b16 %v1258, %v1257
      %v1289 = vpack.c.b16 %v1260, %v1259
      %v1290 = vpack.c.b16 %v1262, %v1261
      %v1291 = vpack.c.b16 %v1264, %v1263
      %v1292 = vpack.c.b16 %v1266, %v1265
      %v1293 = vpack.c.b16 %v1268, %v1267
      %v1294 = vpack.c.b16 %v1270, %v1269
      %1319 = vmatpush.bf16.msra.mxu0 %v1278
      %1320 = vmatpush.bf16.msra.mxu0 %v1277
      %1321 = vmatpush.bf16.msra.mxu0 %v1276
      %1322 = vmatpush.bf16.msra.mxu0 %v1275
      %1323 = vmatpush.bf16.msra.mxu0 %v1274
      %1324 = vmatpush.bf16.msra.mxu0 %v1273
      %1325 = vmatpush.bf16.msra.mxu0 %v1272
      %1326 = vmatpush.bf16.msra.mxu0 %v1271
      %1327 = vmatmul.bf16.gmra.mxu0 %v1151
      %v1328 = vpop.f32.mrf.mxu0
      %v1329 = vadd.f32 0.0, %v1328
      %v1330 = vpop.f32.mrf.mxu0
      %v1331 = vadd.f32 0.0, %v1330
      %1332 = vmatmul.bf16.gmra.mxu0 %v1154
      %v1333 = vpop.f32.mrf.mxu0
      %v1334 = vadd.f32 0.0, %v1333
      %v1335 = vpop.f32.mrf.mxu0
      %v1336 = vadd.f32 0.0, %v1335
      %1337 = vmatmul.bf16.gmra.mxu0 %v1157
      %v1338 = vpop.f32.mrf.mxu0
      %v1339 = vadd.f32 0.0, %v1338
      %v1340 = vpop.f32.mrf.mxu0
      %v1341 = vadd.f32 0.0, %v1340
      %1342 = vmatmul.bf16.gmra.mxu0 %v1160
      %v1343 = vpop.f32.mrf.mxu0
      %v1344 = vadd.f32 0.0, %v1343
      %v1345 = vpop.f32.mrf.mxu0
      %v1346 = vadd.f32 0.0, %v1345
      %1347 = vmatmul.bf16.gmra.mxu0 %v1163
      %v1348 = vpop.f32.mrf.mxu0
      %v1349 = vadd.f32 0.0, %v1348
      %v1350 = vpop.f32.mrf.mxu0
      %v1351 = vadd.f32 0.0, %v1350
      %1352 = vmatmul.bf16.gmra.mxu0 %v1166
      %v1353 = vpop.f32.mrf.mxu0
      %v1354 = vadd.f32 0.0, %v1353
      %v1355 = vpop.f32.mrf.mxu0
      %v1356 = vadd.f32 0.0, %v1355
      %1357 = vmatmul.bf16.gmra.mxu0 %v1169
      %v1358 = vpop.f32.mrf.mxu0
      %v1359 = vadd.f32 0.0, %v1358
      %v1360 = vpop.f32.mrf.mxu0
      %v1361 = vadd.f32 0.0, %v1360
      %1362 = vmatmul.bf16.gmra.mxu0 %v1172
      %v1363 = vpop.f32.mrf.mxu0
      %v1364 = vadd.f32 0.0, %v1363
      %v1365 = vpop.f32.mrf.mxu0
      %v1366 = vadd.f32 0.0, %v1365
      %1367 = vdwg.mxu0
      %1368 = vmatpush.bf16.msra.mxu0 %v1286
      %1369 = vmatpush.bf16.msra.mxu0 %v1285
      %1370 = vmatpush.bf16.msra.mxu0 %v1284
      %1371 = vmatpush.bf16.msra.mxu0 %v1283
      %1372 = vmatpush.bf16.msra.mxu0 %v1282
      %1373 = vmatpush.bf16.msra.mxu0 %v1281
      %1374 = vmatpush.bf16.msra.mxu0 %v1280
      %1375 = vmatpush.bf16.msra.mxu0 %v1279
      %1376 = vmatmul.bf16.gmra.mxu0 %v1152
      %v1377 = vpop.f32.mrf.mxu0
      %v1378 = vadd.f32 %v1329, %v1377
      %v1379 = vpop.f32.mrf.mxu0
      %v1380 = vadd.f32 %v1331, %v1379
      %1381 = vmatmul.bf16.gmra.mxu0 %v1155
      %v1382 = vpop.f32.mrf.mxu0
      %v1383 = vadd.f32 %v1334, %v1382
      %v1384 = vpop.f32.mrf.mxu0
      %v1385 = vadd.f32 %v1336, %v1384
      %1386 = vmatmul.bf16.gmra.mxu0 %v1158
      %v1387 = vpop.f32.mrf.mxu0
      %v1388 = vadd.f32 %v1339, %v1387
      %v1389 = vpop.f32.mrf.mxu0
      %v1390 = vadd.f32 %v1341, %v1389
      %1391 = vmatmul.bf16.gmra.mxu0 %v1161
      %v1392 = vpop.f32.mrf.mxu0
      %v1393 = vadd.f32 %v1344, %v1392
      %v1394 = vpop.f32.mrf.mxu0
      %v1395 = vadd.f32 %v1346, %v1394
      %1396 = vmatmul.bf16.gmra.mxu0 %v1164
      %v1397 = vpop.f32.mrf.mxu0
      %v1398 = vadd.f32 %v1349, %v1397
      %v1399 = vpop.f32.mrf.mxu0
      %v1400 = vadd.f32 %v1351, %v1399
      %1401 = vmatmul.bf16.gmra.mxu0 %v1167
      %v1402 = vpop.f32.mrf.mxu0
      %v1403 = vadd.f32 %v1354, %v1402
      %v1404 = vpop.f32.mrf.mxu0
      %v1405 = vadd.f32 %v1356, %v1404
      %1406 = vmatmul.bf16.gmra.mxu0 %v1170
      %v1407 = vpop.f32.mrf.mxu0
      %v1408 = vadd.f32 %v1359, %v1407
      %v1409 = vpop.f32.mrf.mxu0
      %v1410 = vadd.f32 %v1361, %v1409
      %1411 = vmatmul.bf16.gmra.mxu0 %v1173
      %v1412 = vpop.f32.mrf.mxu0
      %v1413 = vadd.f32 %v1364, %v1412
      %v1414 = vpop.f32.mrf.mxu0
      %v1415 = vadd.f32 %v1366, %v1414
      %1416 = vdwg.mxu0
      %1417 = vmatpush.bf16.msra.mxu0 %v1294
      %1418 = vmatpush.bf16.msra.mxu0 %v1293
      %1419 = vmatpush.bf16.msra.mxu0 %v1292
      %1420 = vmatpush.bf16.msra.mxu0 %v1291
      %1421 = vmatpush.bf16.msra.mxu0 %v1290
      %1422 = vmatpush.bf16.msra.mxu0 %v1289
      %1423 = vmatpush.bf16.msra.mxu0 %v1288
      %1424 = vmatpush.bf16.msra.mxu0 %v1287
      %1425 = vmatmul.bf16.gmra.mxu0 %v1153
      %v1426 = vpop.f32.mrf.mxu0
      %v1427 = vadd.f32 %v1378, %v1426
      %v1428 = vpop.f32.mrf.mxu0
      %v1429 = vadd.f32 %v1380, %v1428
      %1430 = vmatmul.bf16.gmra.mxu0 %v1156
      %v1431 = vpop.f32.mrf.mxu0
      %v1432 = vadd.f32 %v1383, %v1431
      %v1433 = vpop.f32.mrf.mxu0
      %v1434 = vadd.f32 %v1385, %v1433
      %1435 = vmatmul.bf16.gmra.mxu0 %v1159
      %v1436 = vpop.f32.mrf.mxu0
      %v1437 = vadd.f32 %v1388, %v1436
      %v1438 = vpop.f32.mrf.mxu0
      %v1439 = vadd.f32 %v1390, %v1438
      %1440 = vmatmul.bf16.gmra.mxu0 %v1162
      %v1441 = vpop.f32.mrf.mxu0
      %v1442 = vadd.f32 %v1393, %v1441
      %v1443 = vpop.f32.mrf.mxu0
      %v1444 = vadd.f32 %v1395, %v1443
      %1445 = vmatmul.bf16.gmra.mxu0 %v1165
      %v1446 = vpop.f32.mrf.mxu0
      %v1447 = vadd.f32 %v1398, %v1446
      %v1448 = vpop.f32.mrf.mxu0
      %v1449 = vadd.f32 %v1400, %v1448
      %1450 = vmatmul.bf16.gmra.mxu0 %v1168
      %v1451 = vpop.f32.mrf.mxu0
      %v1452 = vadd.f32 %v1403, %v1451
      %v1453 = vpop.f32.mrf.mxu0
      %v1454 = vadd.f32 %v1405, %v1453
      %1455 = vmatmul.bf16.gmra.mxu0 %v1171
      %v1456 = vpop.f32.mrf.mxu0
      %v1457 = vadd.f32 %v1408, %v1456
      %v1458 = vpop.f32.mrf.mxu0
      %v1459 = vadd.f32 %v1410, %v1458
      %1460 = vmatmul.bf16.gmra.mxu0 %v1174
      %v1461 = vpop.f32.mrf.mxu0
      %v1462 = vadd.f32 %v1413, %v1461
      %v1463 = vpop.f32.mrf.mxu0
      %v1464 = vadd.f32 %v1415, %v1463
      %1465 = vdwg.mxu0
      %v1466 = vld [vmem:[%s280] sm:$0xf]
      %v1467 = vld [vmem:[%s280 + $0x4] sm:$0xf]
      %v1468 = vld [vmem:[%s280 + $0x8] sm:$0xf]
      %v1469 = vld [vmem:[%s280 + $0xc] sm:$0xf]
      %v1470 = vld [vmem:[%s280 + $0x10] sm:$0xf]
      %v1471 = vld [vmem:[%s280 + $0x14] sm:$0xf]
      %v1472 = vld [vmem:[%s280 + $0x18] sm:$0xf]
      %v1473 = vld [vmem:[%s280 + $0x1c] sm:$0xf]
      %v1474 = vld [vmem:[%s280 + $0x20] sm:$0xf]
      %v1475 = vld [vmem:[%s280 + $0x24] sm:$0xf]
      %v1476 = vld [vmem:[%s280 + $0x28] sm:$0xf]
      %v1477 = vld [vmem:[%s280 + $0x2c] sm:$0xf]
      %v1478 = vld [vmem:[%s280 + $0x30] sm:$0xf]
      %v1479 = vld [vmem:[%s280 + $0x34] sm:$0xf]
      %v1480 = vld [vmem:[%s280 + $0x38] sm:$0xf]
      %v1481 = vld [vmem:[%s280 + $0x3c] sm:$0xf]
      %v1482 = vunpack.c.l.bf16 %v1466
      %v1483 = vunpack.c.l.bf16 %v1467
      %v1484 = vunpack.c.l.bf16 %v1468
      %v1485 = vunpack.c.l.bf16 %v1469
      %v1486 = vunpack.c.l.bf16 %v1470
      %v1487 = vunpack.c.l.bf16 %v1471
      %v1488 = vunpack.c.l.bf16 %v1472
      %v1489 = vunpack.c.l.bf16 %v1473
      %v1490 = vunpack.c.l.bf16 %v1474
      %v1491 = vunpack.c.l.bf16 %v1475
      %v1492 = vunpack.c.l.bf16 %v1476
      %v1493 = vunpack.c.l.bf16 %v1477
      %v1494 = vunpack.c.l.bf16 %v1478
      %v1495 = vunpack.c.l.bf16 %v1479
      %v1496 = vunpack.c.l.bf16 %v1480
      %v1497 = vunpack.c.l.bf16 %v1481
      %v1498 = vmul.f32 %v1427, %v1482
      %v1499 = vmul.f32 %v1429, %v1483
      %v1500 = vmul.f32 %v1432, %v1484
      %v1501 = vmul.f32 %v1434, %v1485
      %v1502 = vmul.f32 %v1437, %v1486
      %v1503 = vmul.f32 %v1439, %v1487
      %v1504 = vmul.f32 %v1442, %v1488
      %v1505 = vmul.f32 %v1444, %v1489
      %v1506 = vmul.f32 %v1447, %v1490
      %v1507 = vmul.f32 %v1449, %v1491
      %v1508 = vmul.f32 %v1452, %v1492
      %v1509 = vmul.f32 %v1454, %v1493
      %v1510 = vmul.f32 %v1457, %v1494
      %v1511 = vmul.f32 %v1459, %v1495
      %v1512 = vmul.f32 %v1462, %v1496
      %v1513 = vmul.f32 %v1464, %v1497
      %vm1514 = vcmask 261120
      %v1515 = vsel %vm1514, %v1498, 0.0
      %1516 = vadd.xlane.f32.xlu0 %v1515
      %v1517 = vpop.xlane.xlu0 %1516
      %v1518 = vsel %vm1514, %v1499, 0.0
      %1519 = vadd.xlane.f32.xlu0 %v1518
      %v1520 = vpop.xlane.xlu0 %1519
      %v1521 = vsel %vm1514, %v1500, 0.0
      %1522 = vadd.xlane.f32.xlu0 %v1521
      %v1523 = vpop.xlane.xlu0 %1522
      %v1524 = vsel %vm1514, %v1501, 0.0
      %1525 = vadd.xlane.f32.xlu0 %v1524
      %v1526 = vpop.xlane.xlu0 %1525
      %v1527 = vsel %vm1514, %v1502, 0.0
      %1528 = vadd.xlane.f32.xlu0 %v1527
      %v1529 = vpop.xlane.xlu0 %1528
      %v1530 = vsel %vm1514, %v1503, 0.0
      %1531 = vadd.xlane.f32.xlu0 %v1530
      %v1532 = vpop.xlane.xlu0 %1531
      %v1533 = vsel %vm1514, %v1504, 0.0
      %1534 = vadd.xlane.f32.xlu0 %v1533
      %v1535 = vpop.xlane.xlu0 %1534
      %v1536 = vsel %vm1514, %v1505, 0.0
      %1537 = vadd.xlane.f32.xlu0 %v1536
      %v1538 = vpop.xlane.xlu0 %1537
      %v1539 = vsel %vm1514, %v1506, 0.0
      %1540 = vadd.xlane.f32.xlu0 %v1539
      %v1541 = vpop.xlane.xlu0 %1540
      %v1542 = vsel %vm1514, %v1507, 0.0
      %1543 = vadd.xlane.f32.xlu0 %v1542
      %v1544 = vpop.xlane.xlu0 %1543
      %v1545 = vsel %vm1514, %v1508, 0.0
      %1546 = vadd.xlane.f32.xlu0 %v1545
      %v1547 = vpop.xlane.xlu0 %1546
      %v1548 = vsel %vm1514, %v1509, 0.0
      %1549 = vadd.xlane.f32.xlu0 %v1548
      %v1550 = vpop.xlane.xlu0 %1549
      %v1551 = vsel %vm1514, %v1510, 0.0
      %1552 = vadd.xlane.f32.xlu0 %v1551
      %v1553 = vpop.xlane.xlu0 %1552
      %v1554 = vsel %vm1514, %v1511, 0.0
      %1555 = vadd.xlane.f32.xlu0 %v1554
      %v1556 = vpop.xlane.xlu0 %1555
      %v1557 = vsel %vm1514, %v1512, 0.0
      %1558 = vadd.xlane.f32.xlu0 %v1557
      %v1559 = vpop.xlane.xlu0 %1558
      %v1560 = vsel %vm1514, %v1513, 0.0
      %1561 = vadd.xlane.f32.xlu0 %v1560
      %v1562 = vpop.xlane.xlu0 %1561
      %v1579 = vlaneseq
      %v1580 = vand.u32 %v1579, 127
      %v1581 = vperm.slane %v1042, %v1580
      %v1582 = vadd.s32 %v1580, 4294967288
      %v1583 = vperm.slane %v1046, %v1582
      %vm1584 = vcmask 130112
      %v1585 = vsel %vm1584, %v1583, %v1581
      %v1586 = vadd.s32 %v1580, 4294967280
      %v1587 = vperm.slane %v1050, %v1586
      %vm1588 = vcmask 195712
      %v1589 = vsel %vm1588, %v1587, %v1585
      %v1590 = vadd.s32 %v1580, 4294967272
      %v1591 = vperm.slane %v1054, %v1590
      %vm1592 = vcmask 261312
      %v1593 = vsel %vm1592, %v1591, %v1589
      %v1594 = vadd.s32 %v1580, 4294967264
      %v1595 = vperm.slane %v1058, %v1594
      %vm1596 = vcmask 326912
      %v1597 = vsel %vm1596, %v1595, %v1593
      %v1598 = vadd.s32 %v1580, 4294967256
      %v1599 = vperm.slane %v1062, %v1598
      %vm1600 = vcmask 392512
      %v1601 = vsel %vm1600, %v1599, %v1597
      %v1602 = vadd.s32 %v1580, 4294967248
      %v1603 = vperm.slane %v1066, %v1602
      %vm1604 = vcmask 458112
      %v1605 = vsel %vm1604, %v1603, %v1601
      %v1606 = vadd.s32 %v1580, 4294967240
      %v1607 = vperm.slane %v1070, %v1606
      %vm1608 = vcmask 523712
      %v1609 = vsel %vm1608, %v1607, %v1605
      %v1610 = vadd.s32 %v1580, 4294967232
      %v1611 = vperm.slane %v1074, %v1610
      %vm1612 = vcmask 589312
      %v1613 = vsel %vm1612, %v1611, %v1609
      %v1614 = vadd.s32 %v1580, 4294967224
      %v1615 = vperm.slane %v1078, %v1614
      %vm1616 = vcmask 654912
      %v1617 = vsel %vm1616, %v1615, %v1613
      %v1618 = vadd.s32 %v1580, 4294967216
      %v1619 = vperm.slane %v1082, %v1618
      %vm1620 = vcmask 720512
      %v1621 = vsel %vm1620, %v1619, %v1617
      %v1622 = vadd.s32 %v1580, 4294967208
      %v1623 = vperm.slane %v1086, %v1622
      %vm1624 = vcmask 786112
      %v1625 = vsel %vm1624, %v1623, %v1621
      %v1626 = vadd.s32 %v1580, 4294967200
      %v1627 = vperm.slane %v1090, %v1626
      %vm1628 = vcmask 851712
      %v1629 = vsel %vm1628, %v1627, %v1625
      %v1630 = vadd.s32 %v1580, 4294967192
      %v1631 = vperm.slane %v1094, %v1630
      %vm1632 = vcmask 917312
      %v1633 = vsel %vm1632, %v1631, %v1629
      %v1634 = vadd.s32 %v1580, 4294967184
      %v1635 = vperm.slane %v1098, %v1634
      %vm1636 = vcmask 982912
      %v1637 = vsel %vm1636, %v1635, %v1633
      %v1638 = vadd.s32 %v1580, 4294967176
      %v1639 = vperm.slane %v1102, %v1638
      %vm1640 = vcmask 1048512
      %v1641 = vsel %vm1640, %v1639, %v1637
      %v1659 = vperm.slane %v1517, %v1580
      %v1660 = vperm.slane %v1520, %v1582
      %v1661 = vsel %vm1584, %v1660, %v1659
      %v1662 = vperm.slane %v1523, %v1586
      %v1663 = vsel %vm1588, %v1662, %v1661
      %v1664 = vperm.slane %v1526, %v1590
      %v1665 = vsel %vm1592, %v1664, %v1663
      %v1666 = vperm.slane %v1529, %v1594
      %v1667 = vsel %vm1596, %v1666, %v1665
      %v1668 = vperm.slane %v1532, %v1598
      %v1669 = vsel %vm1600, %v1668, %v1667
      %v1670 = vperm.slane %v1535, %v1602
      %v1671 = vsel %vm1604, %v1670, %v1669
      %v1672 = vperm.slane %v1538, %v1606
      %v1673 = vsel %vm1608, %v1672, %v1671
      %v1674 = vperm.slane %v1541, %v1610
      %v1675 = vsel %vm1612, %v1674, %v1673
      %v1676 = vperm.slane %v1544, %v1614
      %v1677 = vsel %vm1616, %v1676, %v1675
      %v1678 = vperm.slane %v1547, %v1618
      %v1679 = vsel %vm1620, %v1678, %v1677
      %v1680 = vperm.slane %v1550, %v1622
      %v1681 = vsel %vm1624, %v1680, %v1679
      %v1682 = vperm.slane %v1553, %v1626
      %v1683 = vsel %vm1628, %v1682, %v1681
      %v1684 = vperm.slane %v1556, %v1630
      %v1685 = vsel %vm1632, %v1684, %v1683
      %v1686 = vperm.slane %v1559, %v1634
      %v1687 = vsel %vm1636, %v1686, %v1685
      %v1688 = vperm.slane %v1562, %v1638
      %v1689 = vsel %vm1640, %v1688, %v1687
      %vm1691 = vcmask 1040384
      %v1692 = vsel %vm1691, %v1641, %v1689
      %1693 = vst [vmem:[%s309] sm:$0x3] %v1692
      %p1694 = scmp.lt.s32.totalorder %s19, 1
      %s1695 = scalar_select %p1694, %s19, 1
      %p1696 = scmp.lt.s32.totalorder %s20, 2
      %s1697 = scalar_select %p1696, %s20, 2
      %s1698 = smul.addr %s1695, 3
      %s1699 = sadd.s32 %s1697, %s1698
      %s1700 = smul.addr %s1699, 2
      %s1701 = scalar_lea.vmem %s4, %s1700
      // Predicated region
      $region37: #{contrastive_correlation_loss.1} parent=35 // pred_check
        %p1702 = pneg %p155
      $region38: #{contrastive_correlation_loss.1} parent=35 // pred_check_branch
        %1704 = sbr.rel (%p1702) target = $region40
      $region39: #{contrastive_correlation_loss.1} parent=35 // pred_region
        _
      $region40: #{contrastive_correlation_loss.1} parent=35 // pred_fallthru
        _
    $region36: #{contrastive_correlation_loss.1} parent=5 // pred_fallthru
      _
    %p1705 = scmp.le.s32.totalorder 2, %s10
    // Predicated region
    $region41: #{contrastive_correlation_loss.1} parent=5 // pred_check
      %p1706 = pneg %p1705
    $region42: #{contrastive_correlation_loss.1} parent=5 // pred_check_branch
      %1708 = sbr.rel (%p1706) target = $region44
    $region43: #{contrastive_correlation_loss.1} parent=5 // pred_region
      %s1709 = ssub.s32 %s10, 2
      // Predicated region
      $region45: #{contrastive_correlation_loss.1} parent=43 // pred_check
        %p1710 = pneg %p161
      $region46: #{contrastive_correlation_loss.1} parent=43 // pred_check_branch
        %1712 = sbr.rel (%p1710) target = $region48
      $region47: #{contrastive_correlation_loss.1} parent=43 // pred_region
        %p1713 = scmp.lt.s32.totalorder %s21, 1
        %s1714 = scalar_select %p1713, %s21, 1
        %p1715 = scmp.lt.s32.totalorder %s22, 2
        %s1716 = scalar_select %p1715, %s22, 2
        %s1717 = smul.addr %s1714, 3
        %s1718 = sadd.s32 %s1716, %s1717
        %s1719 = smul.addr %s1718, 2
        %s1720 = scalar_lea.vmem %s4, %s1719
      $region48: #{contrastive_correlation_loss.1} parent=43 // pred_fallthru
        _
    $region44: #{contrastive_correlation_loss.1} parent=5 // pred_fallthru
      _
  $region6: #{contrastive_correlation_loss.1} parent=0 // loop_footer
    %s14 = sadd.s32 1, %s10
  $region7: #{contrastive_correlation_loss.1} parent=0 // loop_footer_branch
    %9 = sbr.rel target = $region3
  $region8: #{contrastive_correlation_loss.1} parent=0 // loop_exit
    _

</llo_original>
